<compile_context>
chip_gen: v6e
topology: v6e:2x2x1
jax: 0.10.0
libtpu: 0.0.40
codegen_flags: <defaults>
</compile_context>

<pallas_src>
import functools

import jax
import jax.numpy as jnp
from jax.experimental import pallas as pl
from jax.experimental.pallas import tpu as pltpu


# ----------------------------------------------------------------------------
# Fused kernel: init + T GRU steps + softmax-weighted mean, all VMEM-resident.
# Layout: channels on sublanes, pixels on lanes.
# ----------------------------------------------------------------------------
def _fused_raft_avg_kernel(wavg_ref,     # SMEM  (T,)            softmax(w)/T
                           feat_ref,     # VMEM  (Cin_pad, Mt)   pixels on lanes
                           w_init_ref,   # VMEM  (2C, Cin_pad)   [wx.T ; wh.T]
                           b_init_ref,   # VMEM  (2C, 1)         [bx ; bh]
                           w_x_ref,      # VMEM  (2C, C)         [0.5*wz.T ; wc.T]
                           w_h_ref,      # VMEM  (2C, C)         [0.5*uz.T ; uc.T]
                           b_gru_ref,    # VMEM  (2C, 1)         [0.5*bz ; bc]
                           o_ref,        # VMEM  (C, Mt)         weighted-mean h
                           *, c_hidden, iters):
    C = c_hidden

    # init: one (2C,Cin)@(Cin,Mt) MXU dot yields both x (relu) and h0 (tanh).
    init = (jnp.dot(w_init_ref[...], feat_ref[...],
                    preferred_element_type=jnp.float32) + b_init_ref[...])
    x = jnp.maximum(init[:C, :], 0.0)     # context input (constant over iters)
    h0 = jnp.tanh(init[C:, :])            # initial hidden state

    # Loop-invariant x-half of the gate pre-activations, hoisted out of the
    # T-loop (x never changes).  z rows already carry the 0.5 fold for the
    # sigmoid-as-tanh rewrite.
    xzc = (jnp.dot(w_x_ref[...], x, preferred_element_type=jnp.float32)
           + b_gru_ref[...])
    w_h = w_h_ref[...]

    def step(t, carry):
        h, acc = carry
        # one fused (2C,C)@(C,Mt) dot per step -> both gate pre-activations
        zc = xzc + jnp.dot(w_h, h, preferred_element_type=jnp.float32)
        g = jnp.tanh(zc)                  # single EUP stream over (2C, Mt)
        z = 0.5 * g[:C, :] + 0.5          # sigmoid(a) = 0.5*(1 + tanh(a/2))
        c = g[C:, :]
        h = h + z * (c - h)               # (1-z)*h + z*c, one fewer VALU op
        acc = acc + wavg_ref[t] * h       # 1/T already folded into wavg
        return h, acc

    # Short fixed trip count: fully unrolled fori_loop (recurrence bounds the
    # live range; at Mt=256 the carried (C,Mt) state fits in vregs).
    _, acc = jax.lax.fori_loop(0, iters, step, (h0, jnp.zeros_like(h0)),
                               unroll=True)
    o_ref[...] = acc.astype(o_ref.dtype)


def fused_raft_avg(w_avg, featT, w_init, b_init, w_x, w_h, b_gru,
                   *, c_hidden, iters, m_tile):
    cin_pad, m_pad = featT.shape
    C = c_hidden
    grid = (m_pad // m_tile,)

    def const_spec(shape):
        # full-array block, same block index every grid step -> DMA'd once
        return pl.BlockSpec(shape, lambda i, wavg: (0, 0))

    flops = 2 * m_pad * 2 * C * (cin_pad + C * (iters + 1))
    transcendentals = m_pad * (C + iters * 2 * C)
    bytes_accessed = 4 * (m_pad * (cin_pad + C) + w_init.size + b_init.size
                          + w_x.size + w_h.size + b_gru.size)

    return pl.pallas_call(
        functools.partial(_fused_raft_avg_kernel, c_hidden=C, iters=iters),
        out_shape=jax.ShapeDtypeStruct((C, m_pad), jnp.float32),
        grid_spec=pltpu.PrefetchScalarGridSpec(
            num_scalar_prefetch=1,            # averaging weights -> SMEM
            grid=grid,
            in_specs=[
                pl.BlockSpec((cin_pad, m_tile), lambda i, wavg: (0, i)),
                const_spec(w_init.shape),
                const_spec(b_init.shape),
                const_spec(w_x.shape),
                const_spec(w_h.shape),
                const_spec(b_gru.shape),
            ],
            out_specs=pl.BlockSpec((C, m_tile), lambda i, wavg: (0, i)),
        ),
        compiler_params=pltpu.CompilerParams(
            dimension_semantics=("parallel",)),
        cost_estimate=pl.CostEstimate(
            flops=flops, transcendentals=transcendentals,
            bytes_accessed=bytes_accessed),
    )(w_avg, featT, w_init, b_init, w_x, w_h, b_gru)


# ----------------------------------------------------------------------------
# Wrapper glue (plain JAX, one-time layout / packing work only)
# ----------------------------------------------------------------------------
def _avg_pool8(x):  # NCHW, /8 downsample like RAFT's 1/8-resolution features
    B, C, H, W = x.shape
    return x.reshape(B, C, H // 8, 8, W // 8, 8).mean(axis=(3, 5))


def raft_avg_backbone_forward(image1, image2, params, iters=8, m_tile=256):
    B = image1.shape[0]
    feat = jnp.concatenate([_avg_pool8(image1), _avg_pool8(image2)], axis=1)
    _, Cin, h, w = feat.shape
    C = params["wx"].shape[1]
    M = B * h * w

    # NCHW -> channels-on-sublanes / pixels-on-lanes: (Cin, M)
    featT = jnp.transpose(feat, (1, 0, 2, 3)).reshape(Cin, M)
    cin_pad = 8                                     # sublane-align contraction
    m_pad = pl.cdiv(M, m_tile) * m_tile             # lane-tile-align pixels
    featT = jnp.pad(featT, ((0, cin_pad - Cin), (0, m_pad - M)))

    # One-time transposed weight packing (constant-folded under jit, DMA'd
    # once).  The 0.5 on the z rows folds sigmoid(a) = 0.5*(1 + tanh(a/2)).
    w_init = jnp.pad(
        jnp.concatenate([params["wx"].T, params["wh"].T], axis=0),
        ((0, 0), (0, cin_pad - Cin)))                                # (2C,Cin8)
    b_init = jnp.concatenate([params["bx"], params["bh"]], axis=1).T  # (2C,1)
    w_x = jnp.concatenate([0.5 * params["wz"].T, params["wc"].T], axis=0)
    w_h = jnp.concatenate([0.5 * params["uz"].T, params["uc"].T], axis=0)
    b_gru = jnp.concatenate([0.5 * params["bz"], params["bc"]], axis=1).T

    # torch.mean(softmax(w)*stack, 0) == sum_t (softmax(w)[t]/T) * h_t
    w_avg = jax.nn.softmax(params["averaging_weights"][:iters], axis=0) / iters

    outT = fused_raft_avg(w_avg, featT, w_init, b_init, w_x, w_h, b_gru,
                          c_hidden=C, iters=iters, m_tile=m_tile)
    # Single layout change on the (tiny) averaged result: (C, M) -> NCHW
    out = outT[:, :M].reshape(C, B, h, w)
    return jnp.transpose(out, (1, 0, 2, 3)).astype(jnp.float32)


# ----------------------------------------------------------------------------
# Pure-JAX reference matching the module decomposition (separate gates,
# per-iteration NCHW hidden states, softmax weights, mean over the stack).
# ----------------------------------------------------------------------------
def reference_forward(image1, image2, params, iters=8):
    feat = jnp.concatenate([_avg_pool8(image1), _avg_pool8(image2)], axis=1)
    B, Cin, h, w = feat.shape
    C = params["wx"].shape[1]
    feat2d = jnp.transpose(feat, (0, 2, 3, 1)).reshape(B * h * w, Cin)
    x = jnp.maximum(feat2d @ params["wx"] + params["bx"], 0.0)
    hdn = jnp.tanh(feat2d @ params["wh"] + params["bh"])
    hidden_states = []
    for _ in range(iters):
        z = jax.nn.sigmoid(x @ params["wz"] + hdn @ params["uz"] + params["bz"])
        c = jnp.tanh(x @ params["wc"] + hdn @ params["uc"] + params["bc"])
        hdn = (1.0 - z) * hdn + z * c
        hidden_states.append(
            jnp.transpose(hdn.reshape(B, h, w, C), (0, 3, 1, 2)))
    stack = jnp.stack(hidden_states)                            # [T,B,C,h,w]
    wts = jax.nn.softmax(params["averaging_weights"][:iters]).reshape(
        iters, 1, 1, 1, 1)
    return jnp.mean(stack * wts, axis=0).astype(jnp.float32)


# ----------------------------------------------------------------------------
def make_params(key, max_iters=30, c_in=6, c_hidden=32):
    ks = jax.random.split(key, 9)
    s = 0.1
    return {
        # torch.rand(max_iters)
        "averaging_weights": jax.random.uniform(ks[0], (max_iters,), jnp.float32),
        "wx": s * jax.random.normal(ks[1], (c_in, c_hidden), jnp.float32),
        "bx": jnp.zeros((1, c_hidden), jnp.float32),
        "wh": s * jax.random.normal(ks[2], (c_in, c_hidden), jnp.float32),
        "bh": jnp.zeros((1, c_hidden), jnp.float32),
        "wz": s * jax.random.normal(ks[3], (c_hidden, c_hidden), jnp.float32),
        "uz": s * jax.random.normal(ks[4], (c_hidden, c_hidden), jnp.float32),
        "bz": jnp.zeros((1, c_hidden), jnp.float32),
        "wc": s * jax.random.normal(ks[5], (c_hidden, c_hidden), jnp.float32),
        "uc": s * jax.random.normal(ks[6], (c_hidden, c_hidden), jnp.float32),
        "bc": jnp.zeros((1, c_hidden), jnp.float32),
    }


if __name__ == "__main__":
    key = jax.random.PRNGKey(0)
    kp, k1, k2 = jax.random.split(key, 3)
    params = make_params(kp)

    B, H, W, ITERS = 2, 128, 128, 8        # -> M = 2*16*16 = 512 (grid of 2)
    image1 = jax.random.normal(k1, (B, 3, H, W), jnp.float32)
    image2 = jax.random.normal(k2, (B, 3, H, W), jnp.float32)

    fwd = jax.jit(functools.partial(raft_avg_backbone_forward, iters=ITERS))
    out = jax.block_until_ready(fwd(image1, image2, params))

    ref = reference_forward(image1, image2, params, iters=ITERS)

    assert out.shape == (B, 32, H // 8, W // 8)
    assert out.dtype == jnp.float32
    assert jnp.max(jnp.abs(out - ref)) < 1e-4

    print("KERNEL_OK")
</pallas_src>

<mosaic_0001>
module attributes {stable_mosaic.version = 11 : i64} {
  func.func @_fused_raft_avg_kernel(%arg0: i32, %arg1: memref<8xf32, #tpu.memory_space<smem>>, %arg2: memref<8x256xf32, #tpu.memory_space<vmem>>, %arg3: memref<64x8xf32, #tpu.memory_space<vmem>>, %arg4: memref<64x1xf32, #tpu.memory_space<vmem>>, %arg5: memref<64x32xf32, #tpu.memory_space<vmem>>, %arg6: memref<64x32xf32, #tpu.memory_space<vmem>>, %arg7: memref<64x1xf32, #tpu.memory_space<vmem>>, %arg8: memref<32x256xf32, #tpu.memory_space<vmem>>) attributes {dimension_semantics = [#tpu.dimension_semantics<parallel>], iteration_bounds = array<i64: 2>, scalar_prefetch = 1 : i64, scratch_operands = 0 : i64, tpu.core_type = #tpu.core_type<tc>, window_params = [{transform_indices = @transform_0, window_bounds = array<i64: 8, 256>}, {pipeline_mode = #tpu.pipeline_mode<synchronous>, transform_indices = @transform_1, window_bounds = array<i64: 64, 8>}, {pipeline_mode = #tpu.pipeline_mode<synchronous>, transform_indices = @transform_2, window_bounds = array<i64: 64, 1>}, {pipeline_mode = #tpu.pipeline_mode<synchronous>, transform_indices = @transform_3, window_bounds = array<i64: 64, 32>}, {pipeline_mode = #tpu.pipeline_mode<synchronous>, transform_indices = @transform_4, window_bounds = array<i64: 64, 32>}, {pipeline_mode = #tpu.pipeline_mode<synchronous>, transform_indices = @transform_5, window_bounds = array<i64: 64, 1>}, {transform_indices = @transform_6, window_bounds = array<i64: 32, 256>}]} {
    %c0 = arith.constant 0 : index
    %c0_0 = arith.constant 0 : index
    %0 = vector.load %arg3[%c0, %c0_0] : memref<64x8xf32, #tpu.memory_space<vmem>>, vector<64x8xf32>
    %c0_1 = arith.constant 0 : index
    %c0_2 = arith.constant 0 : index
    %1 = vector.load %arg2[%c0_1, %c0_2] : memref<8x256xf32, #tpu.memory_space<vmem>>, vector<8x256xf32>
    %cst = arith.constant dense<0.000000e+00> : vector<64x256xf32>
    %2 = tpu.matmul %0, %1, %cst {dimension_numbers = #tpu.dot_dimension_numbers<[1], [0], [0], [1], [0, 0, 1, 1], [], []>} : vector<64x8xf32>, vector<8x256xf32>, vector<64x256xf32> -> vector<64x256xf32>
    %c0_3 = arith.constant 0 : index
    %c0_4 = arith.constant 0 : index
    %3 = vector.load %arg4[%c0_3, %c0_4] : memref<64x1xf32, #tpu.memory_space<vmem>>, vector<64x1xf32>
    %4 = vector.broadcast %3 : vector<64x1xf32> to vector<64x256xf32>
    %5 = arith.addf %2, %4 : vector<64x256xf32>
    %6 = vector.extract_strided_slice %5 {offsets = [0, 0], sizes = [32, 256], strides = [1, 1]} : vector<64x256xf32> to vector<32x256xf32>
    %cst_5 = arith.constant 0.000000e+00 : f32
    %7 = vector.broadcast %cst_5 : f32 to vector<32x256xf32>
    %8 = arith.maximumf %6, %7 : vector<32x256xf32>
    %9 = vector.extract_strided_slice %5 {offsets = [32, 0], sizes = [32, 256], strides = [1, 1]} : vector<64x256xf32> to vector<32x256xf32>
    %10 = math.tanh %9 : vector<32x256xf32>
    %c0_6 = arith.constant 0 : index
    %c0_7 = arith.constant 0 : index
    %11 = vector.load %arg5[%c0_6, %c0_7] : memref<64x32xf32, #tpu.memory_space<vmem>>, vector<64x32xf32>
    %cst_8 = arith.constant dense<0.000000e+00> : vector<64x256xf32>
    %12 = tpu.matmul %11, %8, %cst_8 {dimension_numbers = #tpu.dot_dimension_numbers<[1], [0], [0], [1], [0, 0, 1, 1], [], []>} : vector<64x32xf32>, vector<32x256xf32>, vector<64x256xf32> -> vector<64x256xf32>
    %c0_9 = arith.constant 0 : index
    %c0_10 = arith.constant 0 : index
    %13 = vector.load %arg7[%c0_9, %c0_10] : memref<64x1xf32, #tpu.memory_space<vmem>>, vector<64x1xf32>
    %14 = vector.broadcast %13 : vector<64x1xf32> to vector<64x256xf32>
    %15 = arith.addf %12, %14 : vector<64x256xf32>
    %c0_11 = arith.constant 0 : index
    %c0_12 = arith.constant 0 : index
    %16 = vector.load %arg6[%c0_11, %c0_12] : memref<64x32xf32, #tpu.memory_space<vmem>>, vector<64x32xf32>
    %cst_13 = arith.constant 0.000000e+00 : f32
    %17 = vector.broadcast %cst_13 : f32 to vector<32x256xf32>
    %c0_i32 = arith.constant 0 : i32
    %cst_14 = arith.constant dense<0.000000e+00> : vector<64x256xf32>
    %18 = tpu.matmul %16, %10, %cst_14 {dimension_numbers = #tpu.dot_dimension_numbers<[1], [0], [0], [1], [0, 0, 1, 1], [], []>} : vector<64x32xf32>, vector<32x256xf32>, vector<64x256xf32> -> vector<64x256xf32>
    %19 = arith.addf %15, %18 : vector<64x256xf32>
    %20 = math.tanh %19 : vector<64x256xf32>
    %21 = vector.extract_strided_slice %20 {offsets = [0, 0], sizes = [32, 256], strides = [1, 1]} : vector<64x256xf32> to vector<32x256xf32>
    %cst_15 = arith.constant 5.000000e-01 : f32
    %22 = vector.broadcast %cst_15 : f32 to vector<32x256xf32>
    %23 = arith.mulf %22, %21 : vector<32x256xf32>
    %cst_16 = arith.constant 5.000000e-01 : f32
    %24 = vector.broadcast %cst_16 : f32 to vector<32x256xf32>
    %25 = arith.addf %23, %24 : vector<32x256xf32>
    %26 = vector.extract_strided_slice %20 {offsets = [32, 0], sizes = [32, 256], strides = [1, 1]} : vector<64x256xf32> to vector<32x256xf32>
    %27 = arith.subf %26, %10 : vector<32x256xf32>
    %28 = arith.mulf %25, %27 : vector<32x256xf32>
    %29 = arith.addf %10, %28 : vector<32x256xf32>
    %30 = arith.index_cast %c0_i32 : i32 to index
    %31 = memref.load %arg1[%30] : memref<8xf32, #tpu.memory_space<smem>>
    %32 = vector.broadcast %31 : f32 to vector<32x256xf32>
    %33 = arith.mulf %32, %29 : vector<32x256xf32>
    %34 = arith.addf %17, %33 : vector<32x256xf32>
    %c1_i32 = arith.constant 1 : i32
    %cst_17 = arith.constant dense<0.000000e+00> : vector<64x256xf32>
    %35 = tpu.matmul %16, %29, %cst_17 {dimension_numbers = #tpu.dot_dimension_numbers<[1], [0], [0], [1], [0, 0, 1, 1], [], []>} : vector<64x32xf32>, vector<32x256xf32>, vector<64x256xf32> -> vector<64x256xf32>
    %36 = arith.addf %15, %35 : vector<64x256xf32>
    %37 = math.tanh %36 : vector<64x256xf32>
    %38 = vector.extract_strided_slice %37 {offsets = [0, 0], sizes = [32, 256], strides = [1, 1]} : vector<64x256xf32> to vector<32x256xf32>
    %cst_18 = arith.constant 5.000000e-01 : f32
    %39 = vector.broadcast %cst_18 : f32 to vector<32x256xf32>
    %40 = arith.mulf %39, %38 : vector<32x256xf32>
    %cst_19 = arith.constant 5.000000e-01 : f32
    %41 = vector.broadcast %cst_19 : f32 to vector<32x256xf32>
    %42 = arith.addf %40, %41 : vector<32x256xf32>
    %43 = vector.extract_strided_slice %37 {offsets = [32, 0], sizes = [32, 256], strides = [1, 1]} : vector<64x256xf32> to vector<32x256xf32>
    %44 = arith.subf %43, %29 : vector<32x256xf32>
    %45 = arith.mulf %42, %44 : vector<32x256xf32>
    %46 = arith.addf %29, %45 : vector<32x256xf32>
    %47 = arith.index_cast %c1_i32 : i32 to index
    %48 = memref.load %arg1[%47] : memref<8xf32, #tpu.memory_space<smem>>
    %49 = vector.broadcast %48 : f32 to vector<32x256xf32>
    %50 = arith.mulf %49, %46 : vector<32x256xf32>
    %51 = arith.addf %34, %50 : vector<32x256xf32>
    %c2_i32 = arith.constant 2 : i32
    %cst_20 = arith.constant dense<0.000000e+00> : vector<64x256xf32>
    %52 = tpu.matmul %16, %46, %cst_20 {dimension_numbers = #tpu.dot_dimension_numbers<[1], [0], [0], [1], [0, 0, 1, 1], [], []>} : vector<64x32xf32>, vector<32x256xf32>, vector<64x256xf32> -> vector<64x256xf32>
    %53 = arith.addf %15, %52 : vector<64x256xf32>
    %54 = math.tanh %53 : vector<64x256xf32>
    %55 = vector.extract_strided_slice %54 {offsets = [0, 0], sizes = [32, 256], strides = [1, 1]} : vector<64x256xf32> to vector<32x256xf32>
    %cst_21 = arith.constant 5.000000e-01 : f32
    %56 = vector.broadcast %cst_21 : f32 to vector<32x256xf32>
    %57 = arith.mulf %56, %55 : vector<32x256xf32>
    %cst_22 = arith.constant 5.000000e-01 : f32
    %58 = vector.broadcast %cst_22 : f32 to vector<32x256xf32>
    %59 = arith.addf %57, %58 : vector<32x256xf32>
    %60 = vector.extract_strided_slice %54 {offsets = [32, 0], sizes = [32, 256], strides = [1, 1]} : vector<64x256xf32> to vector<32x256xf32>
    %61 = arith.subf %60, %46 : vector<32x256xf32>
    %62 = arith.mulf %59, %61 : vector<32x256xf32>
    %63 = arith.addf %46, %62 : vector<32x256xf32>
    %64 = arith.index_cast %c2_i32 : i32 to index
    %65 = memref.load %arg1[%64] : memref<8xf32, #tpu.memory_space<smem>>
    %66 = vector.broadcast %65 : f32 to vector<32x256xf32>
    %67 = arith.mulf %66, %63 : vector<32x256xf32>
    %68 = arith.addf %51, %67 : vector<32x256xf32>
    %c3_i32 = arith.constant 3 : i32
    %cst_23 = arith.constant dense<0.000000e+00> : vector<64x256xf32>
    %69 = tpu.matmul %16, %63, %cst_23 {dimension_numbers = #tpu.dot_dimension_numbers<[1], [0], [0], [1], [0, 0, 1, 1], [], []>} : vector<64x32xf32>, vector<32x256xf32>, vector<64x256xf32> -> vector<64x256xf32>
    %70 = arith.addf %15, %69 : vector<64x256xf32>
    %71 = math.tanh %70 : vector<64x256xf32>
    %72 = vector.extract_strided_slice %71 {offsets = [0, 0], sizes = [32, 256], strides = [1, 1]} : vector<64x256xf32> to vector<32x256xf32>
    %cst_24 = arith.constant 5.000000e-01 : f32
    %73 = vector.broadcast %cst_24 : f32 to vector<32x256xf32>
    %74 = arith.mulf %73, %72 : vector<32x256xf32>
    %cst_25 = arith.constant 5.000000e-01 : f32
    %75 = vector.broadcast %cst_25 : f32 to vector<32x256xf32>
    %76 = arith.addf %74, %75 : vector<32x256xf32>
    %77 = vector.extract_strided_slice %71 {offsets = [32, 0], sizes = [32, 256], strides = [1, 1]} : vector<64x256xf32> to vector<32x256xf32>
    %78 = arith.subf %77, %63 : vector<32x256xf32>
    %79 = arith.mulf %76, %78 : vector<32x256xf32>
    %80 = arith.addf %63, %79 : vector<32x256xf32>
    %81 = arith.index_cast %c3_i32 : i32 to index
    %82 = memref.load %arg1[%81] : memref<8xf32, #tpu.memory_space<smem>>
    %83 = vector.broadcast %82 : f32 to vector<32x256xf32>
    %84 = arith.mulf %83, %80 : vector<32x256xf32>
    %85 = arith.addf %68, %84 : vector<32x256xf32>
    %c4_i32 = arith.constant 4 : i32
    %cst_26 = arith.constant dense<0.000000e+00> : vector<64x256xf32>
    %86 = tpu.matmul %16, %80, %cst_26 {dimension_numbers = #tpu.dot_dimension_numbers<[1], [0], [0], [1], [0, 0, 1, 1], [], []>} : vector<64x32xf32>, vector<32x256xf32>, vector<64x256xf32> -> vector<64x256xf32>
    %87 = arith.addf %15, %86 : vector<64x256xf32>
    %88 = math.tanh %87 : vector<64x256xf32>
    %89 = vector.extract_strided_slice %88 {offsets = [0, 0], sizes = [32, 256], strides = [1, 1]} : vector<64x256xf32> to vector<32x256xf32>
    %cst_27 = arith.constant 5.000000e-01 : f32
    %90 = vector.broadcast %cst_27 : f32 to vector<32x256xf32>
    %91 = arith.mulf %90, %89 : vector<32x256xf32>
    %cst_28 = arith.constant 5.000000e-01 : f32
    %92 = vector.broadcast %cst_28 : f32 to vector<32x256xf32>
    %93 = arith.addf %91, %92 : vector<32x256xf32>
    %94 = vector.extract_strided_slice %88 {offsets = [32, 0], sizes = [32, 256], strides = [1, 1]} : vector<64x256xf32> to vector<32x256xf32>
    %95 = arith.subf %94, %80 : vector<32x256xf32>
    %96 = arith.mulf %93, %95 : vector<32x256xf32>
    %97 = arith.addf %80, %96 : vector<32x256xf32>
    %98 = arith.index_cast %c4_i32 : i32 to index
    %99 = memref.load %arg1[%98] : memref<8xf32, #tpu.memory_space<smem>>
    %100 = vector.broadcast %99 : f32 to vector<32x256xf32>
    %101 = arith.mulf %100, %97 : vector<32x256xf32>
    %102 = arith.addf %85, %101 : vector<32x256xf32>
    %c5_i32 = arith.constant 5 : i32
    %cst_29 = arith.constant dense<0.000000e+00> : vector<64x256xf32>
    %103 = tpu.matmul %16, %97, %cst_29 {dimension_numbers = #tpu.dot_dimension_numbers<[1], [0], [0], [1], [0, 0, 1, 1], [], []>} : vector<64x32xf32>, vector<32x256xf32>, vector<64x256xf32> -> vector<64x256xf32>
    %104 = arith.addf %15, %103 : vector<64x256xf32>
    %105 = math.tanh %104 : vector<64x256xf32>
    %106 = vector.extract_strided_slice %105 {offsets = [0, 0], sizes = [32, 256], strides = [1, 1]} : vector<64x256xf32> to vector<32x256xf32>
    %cst_30 = arith.constant 5.000000e-01 : f32
    %107 = vector.broadcast %cst_30 : f32 to vector<32x256xf32>
    %108 = arith.mulf %107, %106 : vector<32x256xf32>
    %cst_31 = arith.constant 5.000000e-01 : f32
    %109 = vector.broadcast %cst_31 : f32 to vector<32x256xf32>
    %110 = arith.addf %108, %109 : vector<32x256xf32>
    %111 = vector.extract_strided_slice %105 {offsets = [32, 0], sizes = [32, 256], strides = [1, 1]} : vector<64x256xf32> to vector<32x256xf32>
    %112 = arith.subf %111, %97 : vector<32x256xf32>
    %113 = arith.mulf %110, %112 : vector<32x256xf32>
    %114 = arith.addf %97, %113 : vector<32x256xf32>
    %115 = arith.index_cast %c5_i32 : i32 to index
    %116 = memref.load %arg1[%115] : memref<8xf32, #tpu.memory_space<smem>>
    %117 = vector.broadcast %116 : f32 to vector<32x256xf32>
    %118 = arith.mulf %117, %114 : vector<32x256xf32>
    %119 = arith.addf %102, %118 : vector<32x256xf32>
    %c6_i32 = arith.constant 6 : i32
    %cst_32 = arith.constant dense<0.000000e+00> : vector<64x256xf32>
    %120 = tpu.matmul %16, %114, %cst_32 {dimension_numbers = #tpu.dot_dimension_numbers<[1], [0], [0], [1], [0, 0, 1, 1], [], []>} : vector<64x32xf32>, vector<32x256xf32>, vector<64x256xf32> -> vector<64x256xf32>
    %121 = arith.addf %15, %120 : vector<64x256xf32>
    %122 = math.tanh %121 : vector<64x256xf32>
    %123 = vector.extract_strided_slice %122 {offsets = [0, 0], sizes = [32, 256], strides = [1, 1]} : vector<64x256xf32> to vector<32x256xf32>
    %cst_33 = arith.constant 5.000000e-01 : f32
    %124 = vector.broadcast %cst_33 : f32 to vector<32x256xf32>
    %125 = arith.mulf %124, %123 : vector<32x256xf32>
    %cst_34 = arith.constant 5.000000e-01 : f32
    %126 = vector.broadcast %cst_34 : f32 to vector<32x256xf32>
    %127 = arith.addf %125, %126 : vector<32x256xf32>
    %128 = vector.extract_strided_slice %122 {offsets = [32, 0], sizes = [32, 256], strides = [1, 1]} : vector<64x256xf32> to vector<32x256xf32>
    %129 = arith.subf %128, %114 : vector<32x256xf32>
    %130 = arith.mulf %127, %129 : vector<32x256xf32>
    %131 = arith.addf %114, %130 : vector<32x256xf32>
    %132 = arith.index_cast %c6_i32 : i32 to index
    %133 = memref.load %arg1[%132] : memref<8xf32, #tpu.memory_space<smem>>
    %134 = vector.broadcast %133 : f32 to vector<32x256xf32>
    %135 = arith.mulf %134, %131 : vector<32x256xf32>
    %136 = arith.addf %119, %135 : vector<32x256xf32>
    %c7_i32 = arith.constant 7 : i32
    %cst_35 = arith.constant dense<0.000000e+00> : vector<64x256xf32>
    %137 = tpu.matmul %16, %131, %cst_35 {dimension_numbers = #tpu.dot_dimension_numbers<[1], [0], [0], [1], [0, 0, 1, 1], [], []>} : vector<64x32xf32>, vector<32x256xf32>, vector<64x256xf32> -> vector<64x256xf32>
    %138 = arith.addf %15, %137 : vector<64x256xf32>
    %139 = math.tanh %138 : vector<64x256xf32>
    %140 = vector.extract_strided_slice %139 {offsets = [0, 0], sizes = [32, 256], strides = [1, 1]} : vector<64x256xf32> to vector<32x256xf32>
    %cst_36 = arith.constant 5.000000e-01 : f32
    %141 = vector.broadcast %cst_36 : f32 to vector<32x256xf32>
    %142 = arith.mulf %141, %140 : vector<32x256xf32>
    %cst_37 = arith.constant 5.000000e-01 : f32
    %143 = vector.broadcast %cst_37 : f32 to vector<32x256xf32>
    %144 = arith.addf %142, %143 : vector<32x256xf32>
    %145 = vector.extract_strided_slice %139 {offsets = [32, 0], sizes = [32, 256], strides = [1, 1]} : vector<64x256xf32> to vector<32x256xf32>
    %146 = arith.subf %145, %131 : vector<32x256xf32>
    %147 = arith.mulf %144, %146 : vector<32x256xf32>
    %148 = arith.addf %131, %147 : vector<32x256xf32>
    %149 = arith.index_cast %c7_i32 : i32 to index
    %150 = memref.load %arg1[%149] : memref<8xf32, #tpu.memory_space<smem>>
    %151 = vector.broadcast %150 : f32 to vector<32x256xf32>
    %152 = arith.mulf %151, %148 : vector<32x256xf32>
    %153 = arith.addf %136, %152 : vector<32x256xf32>
    %c8_i32 = arith.constant 8 : i32
    %c0_38 = arith.constant 0 : index
    %c0_39 = arith.constant 0 : index
    %154 = vector.load %arg8[%c0_38, %c0_39] : memref<32x256xf32, #tpu.memory_space<vmem>>, vector<32x256xf32>
    tpu.vector_store %arg8[%c0_38, %c0_39], %153 {strides = array<i32>} : memref<32x256xf32, #tpu.memory_space<vmem>>, vector<32x256xf32>,
    return
  }
  func.func @transform_0(%arg0: i32, %arg1: memref<8xf32, #tpu.memory_space<smem>>) -> (i32, i32) {
    %c0_i32 = arith.constant 0 : i32
    %c0_i32_0 = arith.constant 0 : i32
    return %c0_i32, %arg0 : i32, i32
  }
  func.func @transform_1(%arg0: i32, %arg1: memref<8xf32, #tpu.memory_space<smem>>) -> (i32, i32) {
    %c0_i32 = arith.constant 0 : i32
    %c0_i32_0 = arith.constant 0 : i32
    %c0_i32_1 = arith.constant 0 : i32
    return %c0_i32, %c0_i32_0 : i32, i32
  }
  func.func @transform_2(%arg0: i32, %arg1: memref<8xf32, #tpu.memory_space<smem>>) -> (i32, i32) {
    %c0_i32 = arith.constant 0 : i32
    %c0_i32_0 = arith.constant 0 : i32
    %c0_i32_1 = arith.constant 0 : i32
    return %c0_i32, %c0_i32_0 : i32, i32
  }
  func.func @transform_3(%arg0: i32, %arg1: memref<8xf32, #tpu.memory_space<smem>>) -> (i32, i32) {
    %c0_i32 = arith.constant 0 : i32
    %c0_i32_0 = arith.constant 0 : i32
    %c0_i32_1 = arith.constant 0 : i32
    return %c0_i32, %c0_i32_0 : i32, i32
  }
  func.func @transform_4(%arg0: i32, %arg1: memref<8xf32, #tpu.memory_space<smem>>) -> (i32, i32) {
    %c0_i32 = arith.constant 0 : i32
    %c0_i32_0 = arith.constant 0 : i32
    %c0_i32_1 = arith.constant 0 : i32
    return %c0_i32, %c0_i32_0 : i32, i32
  }
  func.func @transform_5(%arg0: i32, %arg1: memref<8xf32, #tpu.memory_space<smem>>) -> (i32, i32) {
    %c0_i32 = arith.constant 0 : i32
    %c0_i32_0 = arith.constant 0 : i32
    %c0_i32_1 = arith.constant 0 : i32
    return %c0_i32, %c0_i32_0 : i32, i32
  }
  func.func @transform_6(%arg0: i32, %arg1: memref<8xf32, #tpu.memory_space<smem>>) -> (i32, i32) {
    %c0_i32 = arith.constant 0 : i32
    %c0_i32_0 = arith.constant 0 : i32
    return %c0_i32, %arg0 : i32, i32
  }
}

</mosaic_0001>

<llo_original>
// kernel: raft_avg_backbone_forward.1
$region0: #{raft_avg_backbone_forward.1}
  #allocation0 [shape = 'u32[]', space=smem, size = 0x4, offset = 0x4, fixed_abs, tag = 'smem constant byte address 0x4 - core index']
  #allocation1 [shape = 'u32[144,128]{1,0:T(1,128)}', space=vmem, size = 0x12000, scoped, tag = 'internal scratch']
  #allocation2 [shape = 's32[1]{0}', space=sflag, size = 0x4, scoped, tag = 'scoped memory for raft_avg_backbone_forward.1']
  #allocation3 [shape = 'u8[512]{0}', space=smem, size = 0x200, scoped, tag = 'prefetched SMEM operand 0']
  %s0 = inlined_call_operand.vmem [shape: f32[8], index: 0, kind: input, shape index: {}]
  %s1 = inlined_call_operand.vmem [shape: f32[8,512], index: 1, kind: input, shape index: {}]
  %s2 = inlined_call_operand.vmem [shape: f32[64,8], index: 2, kind: input, shape index: {}]
  %s3 = inlined_call_operand.vmem [shape: f32[64,1], index: 3, kind: input, shape index: {}]
  %s4 = inlined_call_operand.vmem [shape: f32[64,32], index: 4, kind: input, shape index: {}]
  %s5 = inlined_call_operand.vmem [shape: f32[64,32], index: 5, kind: input, shape index: {}]
  %s6 = inlined_call_operand.vmem [shape: f32[64,1], index: 6, kind: input, shape index: {}]
  %s7 = inlined_call_operand.vmem [shape: f32[32,512], index: 7, kind: output, shape index: {}]
  %s8 = sld [smem:[#allocation0]]
  $region76: #{raft_avg_backbone_forward.1} parent=0
    _
  %s10 = ssub.s32 1, %s8
  %s11 = scalar_select 0, %s10, %s8
  %s12 = sshll.u32 %s0, 4
  %s13 = int_to_ptr.vmem [resolvable:$true] %s12
  %15 = dma.vmem_to_smem %s13, 16, [#allocation3], [#allocation2]
  %16 = dma.done [#allocation2], 16
  %17 = sfence
  $region1: #{raft_avg_backbone_forward.1} parent=0
    #allocation4 [shape = 'u8[65536]{0}', space=vmem, size = 0x10000, scoped, tag = 'output window, operand 0']
    loop: start=0, step=1, limit=4
    $region2: #{raft_avg_backbone_forward.1} parent=1 // loop_pre_header
      _
    $region3: #{raft_avg_backbone_forward.1} parent=1 // loop_header
      %s19 = sphi 0, %s23
      %p20 = scmp.ge.s32.totalorder %s19, 4
      %s29 = sphi 0, %s31
      %s32 = sphi 0, %s29
      %s33 = sphi 0, %s32
      %s49 = sphi 0, %s33
      %s53 = sphi 0, %s53
      %s55 = sphi 0, %s53
      %s56 = sphi 0, %s55
      %s70 = sphi 0, %s56
      %s74 = sphi 0, %s74
      %s76 = sphi 0, %s74
      %s77 = sphi 0, %s76
      %s91 = sphi 0, %s77
      %s95 = sphi 0, %s95
      %s97 = sphi 0, %s95
      %s98 = sphi 0, %s97
      %s112 = sphi 0, %s98
      %s116 = sphi 0, %s116
      %s118 = sphi 0, %s116
      %s119 = sphi 0, %s118
      %s133 = sphi 0, %s119
      %s137 = sphi 0, %s137
      %s139 = sphi 0, %s137
      %s140 = sphi 0, %s139
      %s154 = sphi 0, %s140
      %s160 = sphi 0, %s162
      %s163 = sphi 0, %s160
      %s164 = sphi 0, %s163
      %s180 = sphi 0, %s164
    $region4: #{raft_avg_backbone_forward.1} parent=1 // loop_header_branch
      %22 = sbr.rel (%p20) target = $region8
    $region5: #{raft_avg_backbone_forward.1} parent=1 // loop_body
      %s24 = ssub.s32 %s19, 1
      %s25 = ssub.s32 %s19, 2
      %s26 = sadd.s32 %s19, 1
      %s27 = ssub.s32 %s19, %s26
      %p28 = scmp.eq.s32.totalorder %s27, 0
      %s30 = sadd.s32 %s29, 1
      %s31 = scalar_select %p28, %s29, %s30
      %p34 = pneg %p28
      %p35 = scmp.eq.s32.totalorder %s19, 1
      %p36 = por %p34, %p35
      %p37 = scmp.ne.s32.totalorder %s29, %s32
      %p38 = scmp.eq.s32.totalorder %s19, 0
      %p39 = por %p37, %p38
      %p40 = scmp.ne.s32.totalorder %s29, %s32
      %p41 = scmp.eq.s32.totalorder %s24, 1
      %p42 = por %p40, %p41
      %p43 = scmp.ne.s32.totalorder %s32, %s33
      %p44 = scmp.eq.s32.totalorder %s24, 0
      %p45 = por %p43, %p44
      %p46 = scmp.ne.s32.totalorder %s32, %s33
      %p47 = scmp.eq.s32.totalorder %s25, 1
      %p48 = por %p46, %p47
      %p50 = scmp.ne.s32.totalorder %s33, %s49
      %p51 = scmp.eq.s32.totalorder %s25, 0
      %p52 = por %p50, %p51
      %s54 = sadd.s32 %s53, 1
      %p57 = scmp.eq.s32.totalorder %s19, 1
      %p58 = scmp.ne.s32.totalorder %s53, %s55
      %p59 = scmp.eq.s32.totalorder %s19, 0
      %p60 = por %p58, %p59
      %p61 = scmp.ne.s32.totalorder %s53, %s55
      %p62 = scmp.eq.s32.totalorder %s24, 1
      %p63 = por %p61, %p62
      %p64 = scmp.ne.s32.totalorder %s55, %s56
      %p65 = scmp.eq.s32.totalorder %s24, 0
      %p66 = por %p64, %p65
      %p67 = scmp.ne.s32.totalorder %s55, %s56
      %p68 = scmp.eq.s32.totalorder %s25, 1
      %p69 = por %p67, %p68
      %p71 = scmp.ne.s32.totalorder %s56, %s70
      %p72 = scmp.eq.s32.totalorder %s25, 0
      %p73 = por %p71, %p72
      %s75 = sadd.s32 %s74, 1
      %p78 = scmp.eq.s32.totalorder %s19, 1
      %p79 = scmp.ne.s32.totalorder %s74, %s76
      %p80 = scmp.eq.s32.totalorder %s19, 0
      %p81 = por %p79, %p80
      %p82 = scmp.ne.s32.totalorder %s74, %s76
      %p83 = scmp.eq.s32.totalorder %s24, 1
      %p84 = por %p82, %p83
      %p85 = scmp.ne.s32.totalorder %s76, %s77
      %p86 = scmp.eq.s32.totalorder %s24, 0
      %p87 = por %p85, %p86
      %p88 = scmp.ne.s32.totalorder %s76, %s77
      %p89 = scmp.eq.s32.totalorder %s25, 1
      %p90 = por %p88, %p89
      %p92 = scmp.ne.s32.totalorder %s77, %s91
      %p93 = scmp.eq.s32.totalorder %s25, 0
      %p94 = por %p92, %p93
      %s96 = sadd.s32 %s95, 1
      %p99 = scmp.eq.s32.totalorder %s19, 1
      %p100 = scmp.ne.s32.totalorder %s95, %s97
      %p101 = scmp.eq.s32.totalorder %s19, 0
      %p102 = por %p100, %p101
      %p103 = scmp.ne.s32.totalorder %s95, %s97
      %p104 = scmp.eq.s32.totalorder %s24, 1
      %p105 = por %p103, %p104
      %p106 = scmp.ne.s32.totalorder %s97, %s98
      %p107 = scmp.eq.s32.totalorder %s24, 0
      %p108 = por %p106, %p107
      %p109 = scmp.ne.s32.totalorder %s97, %s98
      %p110 = scmp.eq.s32.totalorder %s25, 1
      %p111 = por %p109, %p110
      %p113 = scmp.ne.s32.totalorder %s98, %s112
      %p114 = scmp.eq.s32.totalorder %s25, 0
      %p115 = por %p113, %p114
      %s117 = sadd.s32 %s116, 1
      %p120 = scmp.eq.s32.totalorder %s19, 1
      %p121 = scmp.ne.s32.totalorder %s116, %s118
      %p122 = scmp.eq.s32.totalorder %s19, 0
      %p123 = por %p121, %p122
      %p124 = scmp.ne.s32.totalorder %s116, %s118
      %p125 = scmp.eq.s32.totalorder %s24, 1
      %p126 = por %p124, %p125
      %p127 = scmp.ne.s32.totalorder %s118, %s119
      %p128 = scmp.eq.s32.totalorder %s24, 0
      %p129 = por %p127, %p128
      %p130 = scmp.ne.s32.totalorder %s118, %s119
      %p131 = scmp.eq.s32.totalorder %s25, 1
      %p132 = por %p130, %p131
      %p134 = scmp.ne.s32.totalorder %s119, %s133
      %p135 = scmp.eq.s32.totalorder %s25, 0
      %p136 = por %p134, %p135
      %s138 = sadd.s32 %s137, 1
      %p141 = scmp.eq.s32.totalorder %s19, 1
      %p142 = scmp.ne.s32.totalorder %s137, %s139
      %p143 = scmp.eq.s32.totalorder %s19, 0
      %p144 = por %p142, %p143
      %p145 = scmp.ne.s32.totalorder %s137, %s139
      %p146 = scmp.eq.s32.totalorder %s24, 1
      %p147 = por %p145, %p146
      %p148 = scmp.ne.s32.totalorder %s139, %s140
      %p149 = scmp.eq.s32.totalorder %s24, 0
      %p150 = por %p148, %p149
      %p151 = scmp.ne.s32.totalorder %s139, %s140
      %p152 = scmp.eq.s32.totalorder %s25, 1
      %p153 = por %p151, %p152
      %p155 = scmp.ne.s32.totalorder %s140, %s154
      %p156 = scmp.eq.s32.totalorder %s25, 0
      %p157 = por %p155, %p156
      %s158 = ssub.s32 %s19, %s26
      %p159 = scmp.eq.s32.totalorder %s158, 0
      %s161 = sadd.s32 %s160, 1
      %s162 = scalar_select %p159, %s160, %s161
      %p165 = pneg %p159
      %p166 = scmp.eq.s32.totalorder %s19, 1
      %p167 = por %p165, %p166
      %p168 = scmp.ne.s32.totalorder %s160, %s163
      %p169 = scmp.eq.s32.totalorder %s19, 0
      %p170 = por %p168, %p169
      %p171 = scmp.ne.s32.totalorder %s160, %s163
      %p172 = scmp.eq.s32.totalorder %s24, 1
      %p173 = por %p171, %p172
      %p174 = scmp.ne.s32.totalorder %s163, %s164
      %p175 = scmp.eq.s32.totalorder %s24, 0
      %p176 = por %p174, %p175
      %p177 = scmp.ne.s32.totalorder %s163, %s164
      %p178 = scmp.eq.s32.totalorder %s25, 1
      %p179 = por %p177, %p178
      %p181 = scmp.ne.s32.totalorder %s164, %s180
      %p182 = scmp.eq.s32.totalorder %s25, 0
      %p183 = por %p181, %p182
      %p184 = scmp.le.s32.totalorder 1, %s19
      %p185 = scmp.lt.s32.totalorder %s19, 3
      %p186 = pnand %p184, %p185
      %p187 = pneg %p186
      // Predicated region
      $region9: #{raft_avg_backbone_forward.1} parent=5 // pred_check
        _
      $region10: #{raft_avg_backbone_forward.1} parent=5 // pred_check_branch
        %189 = sbr.rel (%p186) target = $region12
      $region11: #{raft_avg_backbone_forward.1} parent=5 // pred_region
        %s190 = ssub.s32 %s19, 1
        // Predicated region
        $region13: #{raft_avg_backbone_forward.1} parent=11 // pred_check
          %p191 = pneg %p66
        $region14: #{raft_avg_backbone_forward.1} parent=11 // pred_check_branch
          %193 = sbr.rel (%p191) target = $region16
        $region15: #{raft_avg_backbone_forward.1} parent=11 // pred_region
          _
        $region16: #{raft_avg_backbone_forward.1} parent=11 // pred_fallthru
          _
        // Predicated region
        $region17: #{raft_avg_backbone_forward.1} parent=11 // pred_check
          %p194 = pneg %p87
        $region18: #{raft_avg_backbone_forward.1} parent=11 // pred_check_branch
          %196 = sbr.rel (%p194) target = $region20
        $region19: #{raft_avg_backbone_forward.1} parent=11 // pred_region
          _
        $region20: #{raft_avg_backbone_forward.1} parent=11 // pred_fallthru
          _
        // Predicated region
        $region21: #{raft_avg_backbone_forward.1} parent=11 // pred_check
          %p197 = pneg %p108
        $region22: #{raft_avg_backbone_forward.1} parent=11 // pred_check_branch
          %199 = sbr.rel (%p197) target = $region24
        $region23: #{raft_avg_backbone_forward.1} parent=11 // pred_region
          _
        $region24: #{raft_avg_backbone_forward.1} parent=11 // pred_fallthru
          _
        // Predicated region
        $region25: #{raft_avg_backbone_forward.1} parent=11 // pred_check
          %p200 = pneg %p129
        $region26: #{raft_avg_backbone_forward.1} parent=11 // pred_check_branch
          %202 = sbr.rel (%p200) target = $region28
        $region27: #{raft_avg_backbone_forward.1} parent=11 // pred_region
          _
        $region28: #{raft_avg_backbone_forward.1} parent=11 // pred_fallthru
          _
        // Predicated region
        $region29: #{raft_avg_backbone_forward.1} parent=11 // pred_check
          %p203 = pneg %p150
        $region30: #{raft_avg_backbone_forward.1} parent=11 // pred_check_branch
          %205 = sbr.rel (%p203) target = $region32
        $region31: #{raft_avg_backbone_forward.1} parent=11 // pred_region
          _
        $region32: #{raft_avg_backbone_forward.1} parent=11 // pred_fallthru
          _
      $region12: #{raft_avg_backbone_forward.1} parent=5 // pred_fallthru
        _
      %p206 = scmp.lt.s32.totalorder %s19, 2
      // Predicated region
      $region33: #{raft_avg_backbone_forward.1} parent=5 // pred_check
        %p207 = pneg %p206
      $region34: #{raft_avg_backbone_forward.1} parent=5 // pred_check_branch
        %209 = sbr.rel (%p207) target = $region36
      $region35: #{raft_avg_backbone_forward.1} parent=5 // pred_region
        // Predicated region
        $region37: #{raft_avg_backbone_forward.1} parent=35 // pred_check
          %p210 = pneg %p39
        $region38: #{raft_avg_backbone_forward.1} parent=35 // pred_check_branch
          %212 = sbr.rel (%p210) target = $region40
        $region39: #{raft_avg_backbone_forward.1} parent=35 // pred_region
          %s213 = smul.u32 2, %s19
          %p214 = scmp.lt.s32.totalorder %s213, 3
          %s215 = scalar_select %p214, %s213, 3
          %s216 = smul.addr %s215, 8
          %s217 = scalar_lea.vmem %s1, %s216
          %s218 = smul.u32 2, %s19
        $region40: #{raft_avg_backbone_forward.1} parent=35 // pred_fallthru
          _
      $region36: #{raft_avg_backbone_forward.1} parent=5 // pred_fallthru
        _
      %p219 = scmp.le.s32.totalorder 1, %s19
      %p220 = scmp.lt.s32.totalorder %s19, 3
      %p221 = pnand %p219, %p220
      %p222 = pneg %p221
      // Predicated region
      $region41: #{raft_avg_backbone_forward.1} parent=5 // pred_check
        _
      $region42: #{raft_avg_backbone_forward.1} parent=5 // pred_check_branch
        %224 = sbr.rel (%p221) target = $region44
      $region43: #{raft_avg_backbone_forward.1} parent=5 // pred_region
        %s225 = ssub.s32 %s19, 1
        %s226 = smul.u32 2, %s24
        %p227 = scmp.lt.s32.totalorder %s226, 3
        %s228 = scalar_select %p227, %s226, 3
        %s229 = smul.addr %s228, 8
        %s230 = scalar_lea.vmem %s1, %s229
        %p231 = pneg %p45
        %p232 = pneg %p42
        %p233 = pneg %p66
        %p234 = pneg %p63
        %p235 = pneg %p87
        %p236 = pneg %p84
        %p237 = pneg %p108
        %p238 = pneg %p105
        %p239 = pneg %p129
        %p240 = pneg %p126
        %p241 = pneg %p150
        %p242 = pneg %p147
        %p243 = pneg %p176
        %p244 = pneg %p173
        %s245 = sand.u32 %s163, 1
        %s246 = sand.u32 %s163, 1
        %s247 = smul.addr %s246, 64
        %s248 = scalar_lea.vmem [#allocation4], %s247
        %s249 = smul.u32 2, %s24
        %p250 = scmp.lt.s32.totalorder %s249, 3
        %s251 = scalar_select %p250, %s249, 3
        %s252 = smul.addr %s251, 8
        %s253 = scalar_lea.vmem %s1, %s252
        %s254 = smul.u32 2, %s24
        %s255 = smul.u32 2, %s24
        %v256 = vld [vmem:[%s2] sm:$0xff]
        %v257 = vld [vmem:[%s2 + $0x8] sm:$0xff]
        %v258 = vld [vmem:[%s2 + $0x10] sm:$0xff]
        %v259 = vld [vmem:[%s2 + $0x18] sm:$0xff]
        %v260 = vld [vmem:[%s2 + $0x20] sm:$0xff]
        %v261 = vld [vmem:[%s2 + $0x28] sm:$0xff]
        %v262 = vld [vmem:[%s2 + $0x30] sm:$0xff]
        %v263 = vld [vmem:[%s2 + $0x38] sm:$0xff]
        %v264 = vld [vmem:[%s253] sm:$0xff]
        %v265 = vld [vmem:[%s253 + $0x8] sm:$0xff]
        %v266 = vld [vmem:[%s3] sm:$0xff]
        %v267 = vld [vmem:[%s3 + $0x8] sm:$0xff]
        %v268 = vld [vmem:[%s3 + $0x10] sm:$0xff]
        %v269 = vld [vmem:[%s3 + $0x18] sm:$0xff]
        %v270 = vld [vmem:[%s3 + $0x20] sm:$0xff]
        %v271 = vld [vmem:[%s3 + $0x28] sm:$0xff]
        %v272 = vld [vmem:[%s3 + $0x30] sm:$0xff]
        %v273 = vld [vmem:[%s3 + $0x38] sm:$0xff]
        %275 = vset.pattern.permute.xlu0 0
        %276 = vperm.xlu0 %275, %v266
        %v277 = vpop.permute.xlu0 %276
        %280 = vset.pattern.permute.xlu0 0
        %281 = vperm.xlu0 %280, %v267
        %v282 = vpop.permute.xlu0 %281
        %285 = vset.pattern.permute.xlu0 0
        %286 = vperm.xlu0 %285, %v268
        %v287 = vpop.permute.xlu0 %286
        %290 = vset.pattern.permute.xlu0 0
        %291 = vperm.xlu0 %290, %v269
        %v292 = vpop.permute.xlu0 %291
        %295 = vset.pattern.permute.xlu0 0
        %296 = vperm.xlu0 %295, %v270
        %v297 = vpop.permute.xlu0 %296
        %300 = vset.pattern.permute.xlu0 0
        %301 = vperm.xlu0 %300, %v271
        %v302 = vpop.permute.xlu0 %301
        %305 = vset.pattern.permute.xlu0 0
        %306 = vperm.xlu0 %305, %v272
        %v307 = vpop.permute.xlu0 %306
        %310 = vset.pattern.permute.xlu0 0
        %311 = vperm.xlu0 %310, %v273
        %v312 = vpop.permute.xlu0 %311
        %vm314 = vcmask 64512
        %v316 = vsel %vm314, %v256, 0
        %v319 = vsel %vm314, %v257, 0
        %v322 = vsel %vm314, %v258, 0
        %v325 = vsel %vm314, %v259, 0
        %v328 = vsel %vm314, %v260, 0
        %v331 = vsel %vm314, %v261, 0
        %v334 = vsel %vm314, %v262, 0
        %v337 = vsel %vm314, %v263, 0
        %339 = vmatprep.subr.mxu0 0.0
        %340 = vmatpush1.msra.mxu0 0.0
        %341 = vmatprep.subr.mxu0 0.0
        %342 = vmatpush1.msra.mxu0 0.0
        %343 = vmatprep.subr.mxu0 0.0
        %344 = vmatpush1.msra.mxu0 0.0
        %345 = vmatprep.subr.mxu0 0.0
        %346 = vmatpush1.msra.mxu0 0.0
        %347 = vmatprep.subr.mxu0 0.0
        %348 = vmatpush1.msra.mxu0 0.0
        %349 = vmatprep.subr.mxu0 0.0
        %350 = vmatpush1.msra.mxu0 0.0
        %351 = vmatprep.subr.mxu0 0.0
        %352 = vmatpush1.msra.mxu0 0.0
        %353 = vmatprep.subr.mxu0 0.0
        %354 = vmatpush1.msra.mxu0 0.0
        %355 = vmatprep.subr.mxu0 0.0
        %356 = vmatpush1.msra.mxu0 0.0
        %357 = vmatprep.subr.mxu0 0.0
        %358 = vmatpush1.msra.mxu0 0.0
        %359 = vmatprep.subr.mxu0 0.0
        %360 = vmatpush1.msra.mxu0 0.0
        %361 = vmatprep.subr.mxu0 0.0
        %362 = vmatpush1.msra.mxu0 0.0
        %363 = vmatprep.subr.mxu0 0.0
        %364 = vmatpush1.msra.mxu0 0.0
        %365 = vmatprep.subr.mxu0 0.0
        %366 = vmatpush1.msra.mxu0 0.0
        %367 = vmatprep.subr.mxu0 0.0
        %368 = vmatpush1.msra.mxu0 0.0
        %369 = vmatprep.subr.mxu0 %v265
        %370 = vmatpush1.msra.mxu0 %v264
        %371 = vmatprep.subr.mxu0 0.0
        %372 = vmatpush2.msra.mxu0 0.0
        %373 = vmatprep.subr.mxu0 0.0
        %374 = vmatpush2.msra.mxu0 0.0
        %375 = vmatprep.subr.mxu0 0.0
        %376 = vmatpush2.msra.mxu0 0.0
        %377 = vmatprep.subr.mxu0 0.0
        %378 = vmatpush2.msra.mxu0 0.0
        %379 = vmatprep.subr.mxu0 0.0
        %380 = vmatpush2.msra.mxu0 0.0
        %381 = vmatprep.subr.mxu0 0.0
        %382 = vmatpush2.msra.mxu0 0.0
        %383 = vmatprep.subr.mxu0 0.0
        %384 = vmatpush2.msra.mxu0 0.0
        %385 = vmatprep.subr.mxu0 0.0
        %386 = vmatpush2.msra.mxu0 0.0
        %387 = vmatprep.subr.mxu0 0.0
        %388 = vmatpush2.msra.mxu0 0.0
        %389 = vmatprep.subr.mxu0 0.0
        %390 = vmatpush2.msra.mxu0 0.0
        %391 = vmatprep.subr.mxu0 0.0
        %392 = vmatpush2.msra.mxu0 0.0
        %393 = vmatprep.subr.mxu0 0.0
        %394 = vmatpush2.msra.mxu0 0.0
        %395 = vmatprep.subr.mxu0 0.0
        %396 = vmatpush2.msra.mxu0 0.0
        %397 = vmatprep.subr.mxu0 0.0
        %398 = vmatpush2.msra.mxu0 0.0
        %399 = vmatprep.subr.mxu0 0.0
        %400 = vmatpush2.msra.mxu0 0.0
        %401 = vmatprep.subr.mxu0 0.0
        %402 = vmatpush2.msra.mxu0 0.0
        %403 = vmatprep.mubr.f32.mxu0 0.0
        %404 = vmatmul.mubr.f32.gmra.mxu0 %v316
        %v405 = vpop.f32.mrf.mxu0
        %v406 = vadd.f32 %v277, %v405
        %v407 = vpop.f32.mrf.mxu0
        %v408 = vadd.f32 %v277, %v407
        %409 = vmatprep.mubr.f32.mxu0 0.0
        %410 = vmatmul.mubr.f32.gmra.mxu0 %v319
        %v411 = vpop.f32.mrf.mxu0
        %v412 = vadd.f32 %v282, %v411
        %v413 = vpop.f32.mrf.mxu0
        %v414 = vadd.f32 %v282, %v413
        %415 = vmatprep.mubr.f32.mxu0 0.0
        %416 = vmatmul.mubr.f32.gmra.mxu0 %v322
        %v417 = vpop.f32.mrf.mxu0
        %v418 = vadd.f32 %v287, %v417
        %v419 = vpop.f32.mrf.mxu0
        %v420 = vadd.f32 %v287, %v419
        %421 = vmatprep.mubr.f32.mxu0 0.0
        %422 = vmatmul.mubr.f32.gmra.mxu0 %v325
        %v423 = vpop.f32.mrf.mxu0
        %v424 = vadd.f32 %v292, %v423
        %v425 = vpop.f32.mrf.mxu0
        %v426 = vadd.f32 %v292, %v425
        %427 = vmatprep.mubr.f32.mxu0 0.0
        %428 = vmatmul.mubr.f32.gmra.mxu0 %v328
        %v429 = vpop.f32.mrf.mxu0
        %v430 = vadd.f32 %v297, %v429
        %v431 = vpop.f32.mrf.mxu0
        %v432 = vadd.f32 %v297, %v431
        %433 = vmatprep.mubr.f32.mxu0 0.0
        %434 = vmatmul.mubr.f32.gmra.mxu0 %v331
        %v435 = vpop.f32.mrf.mxu0
        %v436 = vadd.f32 %v302, %v435
        %v437 = vpop.f32.mrf.mxu0
        %v438 = vadd.f32 %v302, %v437
        %439 = vmatprep.mubr.f32.mxu0 0.0
        %440 = vmatmul.mubr.f32.gmra.mxu0 %v334
        %v441 = vpop.f32.mrf.mxu0
        %v442 = vadd.f32 %v307, %v441
        %v443 = vpop.f32.mrf.mxu0
        %v444 = vadd.f32 %v307, %v443
        %445 = vmatprep.mubr.f32.mxu0 0.0
        %446 = vmatmul.mubr.f32.gmra.mxu0 %v337
        %v447 = vpop.f32.mrf.mxu0
        %v448 = vadd.f32 %v312, %v447
        %v449 = vpop.f32.mrf.mxu0
        %v450 = vadd.f32 %v312, %v449
        %451 = vdwg.mxu0
        %v452 = vmax.f32 %v406, 0.0
        %v453 = vmax.f32 %v408, 0.0
        %v454 = vmax.f32 %v412, 0.0
        %v455 = vmax.f32 %v414, 0.0
        %v456 = vmax.f32 %v418, 0.0
        %v457 = vmax.f32 %v420, 0.0
        %v458 = vmax.f32 %v424, 0.0
        %v459 = vmax.f32 %v426, 0.0
        %v460 = vtanh.pop %v430
        %v461 = vtanh.pop %v432
        %v462 = vtanh.pop %v436
        %v463 = vtanh.pop %v438
        %v464 = vtanh.pop %v442
        %v465 = vtanh.pop %v444
        %v466 = vtanh.pop %v448
        %v467 = vtanh.pop %v450
        %v468 = vld [vmem:[%s4] sm:$0xff]
        %v469 = vld [vmem:[%s4 + $0x8] sm:$0xff]
        %v470 = vld [vmem:[%s4 + $0x10] sm:$0xff]
        %v471 = vld [vmem:[%s4 + $0x18] sm:$0xff]
        %v472 = vld [vmem:[%s4 + $0x20] sm:$0xff]
        %v473 = vld [vmem:[%s4 + $0x28] sm:$0xff]
        %v474 = vld [vmem:[%s4 + $0x30] sm:$0xff]
        %v475 = vld [vmem:[%s4 + $0x38] sm:$0xff]
        %v476 = vld [vmem:[%s6] sm:$0xff]
        %v477 = vld [vmem:[%s6 + $0x8] sm:$0xff]
        %v478 = vld [vmem:[%s6 + $0x10] sm:$0xff]
        %v479 = vld [vmem:[%s6 + $0x18] sm:$0xff]
        %v480 = vld [vmem:[%s6 + $0x20] sm:$0xff]
        %v481 = vld [vmem:[%s6 + $0x28] sm:$0xff]
        %v482 = vld [vmem:[%s6 + $0x30] sm:$0xff]
        %v483 = vld [vmem:[%s6 + $0x38] sm:$0xff]
        %485 = vset.pattern.permute.xlu0 0
        %486 = vperm.xlu0 %485, %v476
        %v487 = vpop.permute.xlu0 %486
        %490 = vset.pattern.permute.xlu0 0
        %491 = vperm.xlu0 %490, %v477
        %v492 = vpop.permute.xlu0 %491
        %495 = vset.pattern.permute.xlu0 0
        %496 = vperm.xlu0 %495, %v478
        %v497 = vpop.permute.xlu0 %496
        %500 = vset.pattern.permute.xlu0 0
        %501 = vperm.xlu0 %500, %v479
        %v502 = vpop.permute.xlu0 %501
        %505 = vset.pattern.permute.xlu0 0
        %506 = vperm.xlu0 %505, %v480
        %v507 = vpop.permute.xlu0 %506
        %510 = vset.pattern.permute.xlu0 0
        %511 = vperm.xlu0 %510, %v481
        %v512 = vpop.permute.xlu0 %511
        %515 = vset.pattern.permute.xlu0 0
        %516 = vperm.xlu0 %515, %v482
        %v517 = vpop.permute.xlu0 %516
        %520 = vset.pattern.permute.xlu0 0
        %521 = vperm.xlu0 %520, %v483
        %v522 = vpop.permute.xlu0 %521
        %vm524 = vcmask 261120
        %v526 = vsel %vm524, %v468, 0
        %v529 = vsel %vm524, %v469, 0
        %v532 = vsel %vm524, %v470, 0
        %v535 = vsel %vm524, %v471, 0
        %v538 = vsel %vm524, %v472, 0
        %v541 = vsel %vm524, %v473, 0
        %v544 = vsel %vm524, %v474, 0
        %v547 = vsel %vm524, %v475, 0
        %549 = vmatprep.subr.mxu0 0.0
        %550 = vmatpush1.msra.mxu0 0.0
        %551 = vmatprep.subr.mxu0 0.0
        %552 = vmatpush1.msra.mxu0 0.0
        %553 = vmatprep.subr.mxu0 0.0
        %554 = vmatpush1.msra.mxu0 0.0
        %555 = vmatprep.subr.mxu0 0.0
        %556 = vmatpush1.msra.mxu0 0.0
        %557 = vmatprep.subr.mxu0 0.0
        %558 = vmatpush1.msra.mxu0 0.0
        %559 = vmatprep.subr.mxu0 0.0
        %560 = vmatpush1.msra.mxu0 0.0
        %561 = vmatprep.subr.mxu0 0.0
        %562 = vmatpush1.msra.mxu0 0.0
        %563 = vmatprep.subr.mxu0 0.0
        %564 = vmatpush1.msra.mxu0 0.0
        %565 = vmatprep.subr.mxu0 0.0
        %566 = vmatpush1.msra.mxu0 0.0
        %567 = vmatprep.subr.mxu0 0.0
        %568 = vmatpush1.msra.mxu0 0.0
        %569 = vmatprep.subr.mxu0 0.0
        %570 = vmatpush1.msra.mxu0 0.0
        %571 = vmatprep.subr.mxu0 0.0
        %572 = vmatpush1.msra.mxu0 0.0
        %573 = vmatprep.subr.mxu0 %v459
        %574 = vmatpush1.msra.mxu0 %v458
        %575 = vmatprep.subr.mxu0 %v457
        %576 = vmatpush1.msra.mxu0 %v456
        %577 = vmatprep.subr.mxu0 %v455
        %578 = vmatpush1.msra.mxu0 %v454
        %579 = vmatprep.subr.mxu0 %v453
        %580 = vmatpush1.msra.mxu0 %v452
        %581 = vmatprep.subr.mxu0 0.0
        %582 = vmatpush2.msra.mxu0 0.0
        %583 = vmatprep.subr.mxu0 0.0
        %584 = vmatpush2.msra.mxu0 0.0
        %585 = vmatprep.subr.mxu0 0.0
        %586 = vmatpush2.msra.mxu0 0.0
        %587 = vmatprep.subr.mxu0 0.0
        %588 = vmatpush2.msra.mxu0 0.0
        %589 = vmatprep.subr.mxu0 0.0
        %590 = vmatpush2.msra.mxu0 0.0
        %591 = vmatprep.subr.mxu0 0.0
        %592 = vmatpush2.msra.mxu0 0.0
        %593 = vmatprep.subr.mxu0 0.0
        %594 = vmatpush2.msra.mxu0 0.0
        %595 = vmatprep.subr.mxu0 0.0
        %596 = vmatpush2.msra.mxu0 0.0
        %597 = vmatprep.subr.mxu0 0.0
        %598 = vmatpush2.msra.mxu0 0.0
        %599 = vmatprep.subr.mxu0 0.0
        %600 = vmatpush2.msra.mxu0 0.0
        %601 = vmatprep.subr.mxu0 0.0
        %602 = vmatpush2.msra.mxu0 0.0
        %603 = vmatprep.subr.mxu0 0.0
        %604 = vmatpush2.msra.mxu0 0.0
        %605 = vmatprep.subr.mxu0 0.0
        %606 = vmatpush2.msra.mxu0 0.0
        %607 = vmatprep.subr.mxu0 0.0
        %608 = vmatpush2.msra.mxu0 0.0
        %609 = vmatprep.subr.mxu0 0.0
        %610 = vmatpush2.msra.mxu0 0.0
        %611 = vmatprep.subr.mxu0 0.0
        %612 = vmatpush2.msra.mxu0 0.0
        %613 = vmatprep.mubr.f32.mxu0 0.0
        %614 = vmatmul.mubr.f32.gmra.mxu0 %v526
        %v615 = vpop.f32.mrf.mxu0
        %v616 = vadd.f32 %v487, %v615
        %v617 = vpop.f32.mrf.mxu0
        %v618 = vadd.f32 %v487, %v617
        %619 = vmatprep.mubr.f32.mxu0 0.0
        %620 = vmatmul.mubr.f32.gmra.mxu0 %v529
        %v621 = vpop.f32.mrf.mxu0
        %v622 = vadd.f32 %v492, %v621
        %v623 = vpop.f32.mrf.mxu0
        %v624 = vadd.f32 %v492, %v623
        %625 = vmatprep.mubr.f32.mxu0 0.0
        %626 = vmatmul.mubr.f32.gmra.mxu0 %v532
        %v627 = vpop.f32.mrf.mxu0
        %v628 = vadd.f32 %v497, %v627
        %v629 = vpop.f32.mrf.mxu0
        %v630 = vadd.f32 %v497, %v629
        %631 = vmatprep.mubr.f32.mxu0 0.0
        %632 = vmatmul.mubr.f32.gmra.mxu0 %v535
        %v633 = vpop.f32.mrf.mxu0
        %v634 = vadd.f32 %v502, %v633
        %v635 = vpop.f32.mrf.mxu0
        %v636 = vadd.f32 %v502, %v635
        %637 = vmatprep.mubr.f32.mxu0 0.0
        %638 = vmatmul.mubr.f32.gmra.mxu0 %v538
        %v639 = vpop.f32.mrf.mxu0
        %v640 = vadd.f32 %v507, %v639
        %v641 = vpop.f32.mrf.mxu0
        %v642 = vadd.f32 %v507, %v641
        %643 = vmatprep.mubr.f32.mxu0 0.0
        %644 = vmatmul.mubr.f32.gmra.mxu0 %v541
        %v645 = vpop.f32.mrf.mxu0
        %v646 = vadd.f32 %v512, %v645
        %v647 = vpop.f32.mrf.mxu0
        %v648 = vadd.f32 %v512, %v647
        %649 = vmatprep.mubr.f32.mxu0 0.0
        %650 = vmatmul.mubr.f32.gmra.mxu0 %v544
        %v651 = vpop.f32.mrf.mxu0
        %v652 = vadd.f32 %v517, %v651
        %v653 = vpop.f32.mrf.mxu0
        %v654 = vadd.f32 %v517, %v653
        %655 = vmatprep.mubr.f32.mxu0 0.0
        %656 = vmatmul.mubr.f32.gmra.mxu0 %v547
        %v657 = vpop.f32.mrf.mxu0
        %v658 = vadd.f32 %v522, %v657
        %v659 = vpop.f32.mrf.mxu0
        %v660 = vadd.f32 %v522, %v659
        %661 = vdwg.mxu0
        %v662 = vld [vmem:[%s5] sm:$0xff]
        %v663 = vld [vmem:[%s5 + $0x8] sm:$0xff]
        %v664 = vld [vmem:[%s5 + $0x10] sm:$0xff]
        %v665 = vld [vmem:[%s5 + $0x18] sm:$0xff]
        %v666 = vld [vmem:[%s5 + $0x20] sm:$0xff]
        %v667 = vld [vmem:[%s5 + $0x28] sm:$0xff]
        %v668 = vld [vmem:[%s5 + $0x30] sm:$0xff]
        %v669 = vld [vmem:[%s5 + $0x38] sm:$0xff]
        %v671 = vsel %vm524, %v662, 0
        %v674 = vsel %vm524, %v663, 0
        %v677 = vsel %vm524, %v664, 0
        %v680 = vsel %vm524, %v665, 0
        %v683 = vsel %vm524, %v666, 0
        %v686 = vsel %vm524, %v667, 0
        %v689 = vsel %vm524, %v668, 0
        %v692 = vsel %vm524, %v669, 0
        %694 = vmatprep.subr.mxu0 0.0
        %695 = vmatpush1.msra.mxu0 0.0
        %696 = vmatprep.subr.mxu0 0.0
        %697 = vmatpush1.msra.mxu0 0.0
        %698 = vmatprep.subr.mxu0 0.0
        %699 = vmatpush1.msra.mxu0 0.0
        %700 = vmatprep.subr.mxu0 0.0
        %701 = vmatpush1.msra.mxu0 0.0
        %702 = vmatprep.subr.mxu0 0.0
        %703 = vmatpush1.msra.mxu0 0.0
        %704 = vmatprep.subr.mxu0 0.0
        %705 = vmatpush1.msra.mxu0 0.0
        %706 = vmatprep.subr.mxu0 0.0
        %707 = vmatpush1.msra.mxu0 0.0
        %708 = vmatprep.subr.mxu0 0.0
        %709 = vmatpush1.msra.mxu0 0.0
        %710 = vmatprep.subr.mxu0 0.0
        %711 = vmatpush1.msra.mxu0 0.0
        %712 = vmatprep.subr.mxu0 0.0
        %713 = vmatpush1.msra.mxu0 0.0
        %714 = vmatprep.subr.mxu0 0.0
        %715 = vmatpush1.msra.mxu0 0.0
        %716 = vmatprep.subr.mxu0 0.0
        %717 = vmatpush1.msra.mxu0 0.0
        %718 = vmatprep.subr.mxu0 %v467
        %719 = vmatpush1.msra.mxu0 %v466
        %720 = vmatprep.subr.mxu0 %v465
        %721 = vmatpush1.msra.mxu0 %v464
        %722 = vmatprep.subr.mxu0 %v463
        %723 = vmatpush1.msra.mxu0 %v462
        %724 = vmatprep.subr.mxu0 %v461
        %725 = vmatpush1.msra.mxu0 %v460
        %726 = vmatprep.subr.mxu0 0.0
        %727 = vmatpush2.msra.mxu0 0.0
        %728 = vmatprep.subr.mxu0 0.0
        %729 = vmatpush2.msra.mxu0 0.0
        %730 = vmatprep.subr.mxu0 0.0
        %731 = vmatpush2.msra.mxu0 0.0
        %732 = vmatprep.subr.mxu0 0.0
        %733 = vmatpush2.msra.mxu0 0.0
        %734 = vmatprep.subr.mxu0 0.0
        %735 = vmatpush2.msra.mxu0 0.0
        %736 = vmatprep.subr.mxu0 0.0
        %737 = vmatpush2.msra.mxu0 0.0
        %738 = vmatprep.subr.mxu0 0.0
        %739 = vmatpush2.msra.mxu0 0.0
        %740 = vmatprep.subr.mxu0 0.0
        %741 = vmatpush2.msra.mxu0 0.0
        %742 = vmatprep.subr.mxu0 0.0
        %743 = vmatpush2.msra.mxu0 0.0
        %744 = vmatprep.subr.mxu0 0.0
        %745 = vmatpush2.msra.mxu0 0.0
        %746 = vmatprep.subr.mxu0 0.0
        %747 = vmatpush2.msra.mxu0 0.0
        %748 = vmatprep.subr.mxu0 0.0
        %749 = vmatpush2.msra.mxu0 0.0
        %750 = vmatprep.subr.mxu0 0.0
        %751 = vmatpush2.msra.mxu0 0.0
        %752 = vmatprep.subr.mxu0 0.0
        %753 = vmatpush2.msra.mxu0 0.0
        %754 = vmatprep.subr.mxu0 0.0
        %755 = vmatpush2.msra.mxu0 0.0
        %756 = vmatprep.subr.mxu0 0.0
        %757 = vmatpush2.msra.mxu0 0.0
        %758 = vmatprep.mubr.f32.mxu0 0.0
        %759 = vmatmul.mubr.f32.gmra.mxu0 %v671
        %v760 = vpop.f32.mrf.mxu0
        %v761 = vadd.f32 0.0, %v760
        %v762 = vpop.f32.mrf.mxu0
        %v763 = vadd.f32 0.0, %v762
        %764 = vmatprep.mubr.f32.mxu0 0.0
        %765 = vmatmul.mubr.f32.gmra.mxu0 %v674
        %v766 = vpop.f32.mrf.mxu0
        %v767 = vadd.f32 0.0, %v766
        %v768 = vpop.f32.mrf.mxu0
        %v769 = vadd.f32 0.0, %v768
        %770 = vmatprep.mubr.f32.mxu0 0.0
        %771 = vmatmul.mubr.f32.gmra.mxu0 %v677
        %v772 = vpop.f32.mrf.mxu0
        %v773 = vadd.f32 0.0, %v772
        %v774 = vpop.f32.mrf.mxu0
        %v775 = vadd.f32 0.0, %v774
        %776 = vmatprep.mubr.f32.mxu0 0.0
        %777 = vmatmul.mubr.f32.gmra.mxu0 %v680
        %v778 = vpop.f32.mrf.mxu0
        %v779 = vadd.f32 0.0, %v778
        %v780 = vpop.f32.mrf.mxu0
        %v781 = vadd.f32 0.0, %v780
        %782 = vmatprep.mubr.f32.mxu0 0.0
        %783 = vmatmul.mubr.f32.gmra.mxu0 %v683
        %v784 = vpop.f32.mrf.mxu0
        %v785 = vadd.f32 0.0, %v784
        %v786 = vpop.f32.mrf.mxu0
        %v787 = vadd.f32 0.0, %v786
        %788 = vmatprep.mubr.f32.mxu0 0.0
        %789 = vmatmul.mubr.f32.gmra.mxu0 %v686
        %v790 = vpop.f32.mrf.mxu0
        %v791 = vadd.f32 0.0, %v790
        %v792 = vpop.f32.mrf.mxu0
        %v793 = vadd.f32 0.0, %v792
        %794 = vmatprep.mubr.f32.mxu0 0.0
        %795 = vmatmul.mubr.f32.gmra.mxu0 %v689
        %v796 = vpop.f32.mrf.mxu0
        %v797 = vadd.f32 0.0, %v796
        %v798 = vpop.f32.mrf.mxu0
        %v799 = vadd.f32 0.0, %v798
        %800 = vmatprep.mubr.f32.mxu0 0.0
        %801 = vmatmul.mubr.f32.gmra.mxu0 %v692
        %v802 = vpop.f32.mrf.mxu0
        %v803 = vadd.f32 0.0, %v802
        %v804 = vpop.f32.mrf.mxu0
        %v805 = vadd.f32 0.0, %v804
        %806 = vdwg.mxu0
        %v807 = vadd.f32 %v616, %v761
        %v808 = vadd.f32 %v618, %v763
        %v809 = vadd.f32 %v622, %v767
        %v810 = vadd.f32 %v624, %v769
        %v811 = vadd.f32 %v628, %v773
        %v812 = vadd.f32 %v630, %v775
        %v813 = vadd.f32 %v634, %v779
        %v814 = vadd.f32 %v636, %v781
        %v815 = vadd.f32 %v640, %v785
        %v816 = vadd.f32 %v642, %v787
        %v817 = vadd.f32 %v646, %v791
        %v818 = vadd.f32 %v648, %v793
        %v819 = vadd.f32 %v652, %v797
        %v820 = vadd.f32 %v654, %v799
        %v821 = vadd.f32 %v658, %v803
        %v822 = vadd.f32 %v660, %v805
        %v823 = vtanh.pop %v807
        %v824 = vtanh.pop %v808
        %v825 = vtanh.pop %v809
        %v826 = vtanh.pop %v810
        %v827 = vtanh.pop %v811
        %v828 = vtanh.pop %v812
        %v829 = vtanh.pop %v813
        %v830 = vtanh.pop %v814
        %v831 = vtanh.pop %v815
        %v832 = vtanh.pop %v816
        %v833 = vtanh.pop %v817
        %v834 = vtanh.pop %v818
        %v835 = vtanh.pop %v819
        %v836 = vtanh.pop %v820
        %v837 = vtanh.pop %v821
        %v838 = vtanh.pop %v822
        %v839 = vmul.f32 %v823, 0.5
        %v840 = vmul.f32 %v824, 0.5
        %v841 = vmul.f32 %v825, 0.5
        %v842 = vmul.f32 %v826, 0.5
        %v843 = vmul.f32 %v827, 0.5
        %v844 = vmul.f32 %v828, 0.5
        %v845 = vmul.f32 %v829, 0.5
        %v846 = vmul.f32 %v830, 0.5
        %v847 = vadd.f32 %v839, 0.5
        %v848 = vadd.f32 %v840, 0.5
        %v849 = vadd.f32 %v841, 0.5
        %v850 = vadd.f32 %v842, 0.5
        %v851 = vadd.f32 %v843, 0.5
        %v852 = vadd.f32 %v844, 0.5
        %v853 = vadd.f32 %v845, 0.5
        %v854 = vadd.f32 %v846, 0.5
        %v855 = vsub.f32 %v831, %v460
        %v856 = vsub.f32 %v832, %v461
        %v857 = vsub.f32 %v833, %v462
        %v858 = vsub.f32 %v834, %v463
        %v859 = vsub.f32 %v835, %v464
        %v860 = vsub.f32 %v836, %v465
        %v861 = vsub.f32 %v837, %v466
        %v862 = vsub.f32 %v838, %v467
        %v863 = vmul.f32 %v847, %v855
        %v864 = vmul.f32 %v848, %v856
        %v865 = vmul.f32 %v849, %v857
        %v866 = vmul.f32 %v850, %v858
        %v867 = vmul.f32 %v851, %v859
        %v868 = vmul.f32 %v852, %v860
        %v869 = vmul.f32 %v853, %v861
        %v870 = vmul.f32 %v854, %v862
        %v871 = vadd.f32 %v460, %v863
        %v872 = vadd.f32 %v461, %v864
        %v873 = vadd.f32 %v462, %v865
        %v874 = vadd.f32 %v463, %v866
        %v875 = vadd.f32 %v464, %v867
        %v876 = vadd.f32 %v465, %v868
        %v877 = vadd.f32 %v466, %v869
        %v878 = vadd.f32 %v467, %v870
        %s879 = sld [smem:[#allocation3]]
        %v880 = vstv %s879
        %v881 = vmul.f32 %v880, %v871
        %v882 = vmul.f32 %v880, %v872
        %v883 = vmul.f32 %v880, %v873
        %v884 = vmul.f32 %v880, %v874
        %v885 = vmul.f32 %v880, %v875
        %v886 = vmul.f32 %v880, %v876
        %v887 = vmul.f32 %v880, %v877
        %v888 = vmul.f32 %v880, %v878
        %v889 = vadd.f32 %v881, 0.0
        %v890 = vadd.f32 %v882, 0.0
        %v891 = vadd.f32 %v883, 0.0
        %v892 = vadd.f32 %v884, 0.0
        %v893 = vadd.f32 %v885, 0.0
        %v894 = vadd.f32 %v886, 0.0
        %v895 = vadd.f32 %v887, 0.0
        %v896 = vadd.f32 %v888, 0.0
        %897 = vmatprep.subr.mxu0 0.0
        %898 = vmatpush1.msra.mxu0 0.0
        %899 = vmatprep.subr.mxu0 0.0
        %900 = vmatpush1.msra.mxu0 0.0
        %901 = vmatprep.subr.mxu0 0.0
        %902 = vmatpush1.msra.mxu0 0.0
        %903 = vmatprep.subr.mxu0 0.0
        %904 = vmatpush1.msra.mxu0 0.0
        %905 = vmatprep.subr.mxu0 0.0
        %906 = vmatpush1.msra.mxu0 0.0
        %907 = vmatprep.subr.mxu0 0.0
        %908 = vmatpush1.msra.mxu0 0.0
        %909 = vmatprep.subr.mxu0 0.0
        %910 = vmatpush1.msra.mxu0 0.0
        %911 = vmatprep.subr.mxu0 0.0
        %912 = vmatpush1.msra.mxu0 0.0
        %913 = vmatprep.subr.mxu0 0.0
        %914 = vmatpush1.msra.mxu0 0.0
        %915 = vmatprep.subr.mxu0 0.0
        %916 = vmatpush1.msra.mxu0 0.0
        %917 = vmatprep.subr.mxu0 0.0
        %918 = vmatpush1.msra.mxu0 0.0
        %919 = vmatprep.subr.mxu0 0.0
        %920 = vmatpush1.msra.mxu0 0.0
        %921 = vmatprep.subr.mxu0 %v878
        %922 = vmatpush1.msra.mxu0 %v877
        %923 = vmatprep.subr.mxu0 %v876
        %924 = vmatpush1.msra.mxu0 %v875
        %925 = vmatprep.subr.mxu0 %v874
        %926 = vmatpush1.msra.mxu0 %v873
        %927 = vmatprep.subr.mxu0 %v872
        %928 = vmatpush1.msra.mxu0 %v871
        %929 = vmatprep.subr.mxu0 0.0
        %930 = vmatpush2.msra.mxu0 0.0
        %931 = vmatprep.subr.mxu0 0.0
        %932 = vmatpush2.msra.mxu0 0.0
        %933 = vmatprep.subr.mxu0 0.0
        %934 = vmatpush2.msra.mxu0 0.0
        %935 = vmatprep.subr.mxu0 0.0
        %936 = vmatpush2.msra.mxu0 0.0
        %937 = vmatprep.subr.mxu0 0.0
        %938 = vmatpush2.msra.mxu0 0.0
        %939 = vmatprep.subr.mxu0 0.0
        %940 = vmatpush2.msra.mxu0 0.0
        %941 = vmatprep.subr.mxu0 0.0
        %942 = vmatpush2.msra.mxu0 0.0
        %943 = vmatprep.subr.mxu0 0.0
        %944 = vmatpush2.msra.mxu0 0.0
        %945 = vmatprep.subr.mxu0 0.0
        %946 = vmatpush2.msra.mxu0 0.0
        %947 = vmatprep.subr.mxu0 0.0
        %948 = vmatpush2.msra.mxu0 0.0
        %949 = vmatprep.subr.mxu0 0.0
        %950 = vmatpush2.msra.mxu0 0.0
        %951 = vmatprep.subr.mxu0 0.0
        %952 = vmatpush2.msra.mxu0 0.0
        %953 = vmatprep.subr.mxu0 0.0
        %954 = vmatpush2.msra.mxu0 0.0
        %955 = vmatprep.subr.mxu0 0.0
        %956 = vmatpush2.msra.mxu0 0.0
        %957 = vmatprep.subr.mxu0 0.0
        %958 = vmatpush2.msra.mxu0 0.0
        %959 = vmatprep.subr.mxu0 0.0
        %960 = vmatpush2.msra.mxu0 0.0
        %961 = vmatprep.mubr.f32.mxu0 0.0
        %962 = vmatmul.mubr.f32.gmra.mxu0 %v671
        %v963 = vpop.f32.mrf.mxu0
        %v964 = vadd.f32 0.0, %v963
        %v965 = vpop.f32.mrf.mxu0
        %v966 = vadd.f32 0.0, %v965
        %967 = vmatprep.mubr.f32.mxu0 0.0
        %968 = vmatmul.mubr.f32.gmra.mxu0 %v674
        %v969 = vpop.f32.mrf.mxu0
        %v970 = vadd.f32 0.0, %v969
        %v971 = vpop.f32.mrf.mxu0
        %v972 = vadd.f32 0.0, %v971
        %973 = vmatprep.mubr.f32.mxu0 0.0
        %974 = vmatmul.mubr.f32.gmra.mxu0 %v677
        %v975 = vpop.f32.mrf.mxu0
        %v976 = vadd.f32 0.0, %v975
        %v977 = vpop.f32.mrf.mxu0
        %v978 = vadd.f32 0.0, %v977
        %979 = vmatprep.mubr.f32.mxu0 0.0
        %980 = vmatmul.mubr.f32.gmra.mxu0 %v680
        %v981 = vpop.f32.mrf.mxu0
        %v982 = vadd.f32 0.0, %v981
        %v983 = vpop.f32.mrf.mxu0
        %v984 = vadd.f32 0.0, %v983
        %985 = vmatprep.mubr.f32.mxu0 0.0
        %986 = vmatmul.mubr.f32.gmra.mxu0 %v683
        %v987 = vpop.f32.mrf.mxu0
        %v988 = vadd.f32 0.0, %v987
        %v989 = vpop.f32.mrf.mxu0
        %v990 = vadd.f32 0.0, %v989
        %991 = vmatprep.mubr.f32.mxu0 0.0
        %992 = vmatmul.mubr.f32.gmra.mxu0 %v686
        %v993 = vpop.f32.mrf.mxu0
        %v994 = vadd.f32 0.0, %v993
        %v995 = vpop.f32.mrf.mxu0
        %v996 = vadd.f32 0.0, %v995
        %997 = vmatprep.mubr.f32.mxu0 0.0
        %998 = vmatmul.mubr.f32.gmra.mxu0 %v689
        %v999 = vpop.f32.mrf.mxu0
        %v1000 = vadd.f32 0.0, %v999
        %v1001 = vpop.f32.mrf.mxu0
        %v1002 = vadd.f32 0.0, %v1001
        %1003 = vmatprep.mubr.f32.mxu0 0.0
        %1004 = vmatmul.mubr.f32.gmra.mxu0 %v692
        %v1005 = vpop.f32.mrf.mxu0
        %v1006 = vadd.f32 0.0, %v1005
        %v1007 = vpop.f32.mrf.mxu0
        %v1008 = vadd.f32 0.0, %v1007
        %1009 = vdwg.mxu0
        %v1010 = vadd.f32 %v616, %v964
        %v1011 = vadd.f32 %v618, %v966
        %v1012 = vadd.f32 %v622, %v970
        %v1013 = vadd.f32 %v624, %v972
        %v1014 = vadd.f32 %v628, %v976
        %v1015 = vadd.f32 %v630, %v978
        %v1016 = vadd.f32 %v634, %v982
        %v1017 = vadd.f32 %v636, %v984
        %v1018 = vadd.f32 %v640, %v988
        %v1019 = vadd.f32 %v642, %v990
        %v1020 = vadd.f32 %v646, %v994
        %v1021 = vadd.f32 %v648, %v996
        %v1022 = vadd.f32 %v652, %v1000
        %v1023 = vadd.f32 %v654, %v1002
        %v1024 = vadd.f32 %v658, %v1006
        %v1025 = vadd.f32 %v660, %v1008
        %v1026 = vtanh.pop %v1010
        %v1027 = vtanh.pop %v1011
        %v1028 = vtanh.pop %v1012
        %v1029 = vtanh.pop %v1013
        %v1030 = vtanh.pop %v1014
        %v1031 = vtanh.pop %v1015
        %v1032 = vtanh.pop %v1016
        %v1033 = vtanh.pop %v1017
        %v1034 = vtanh.pop %v1018
        %v1035 = vtanh.pop %v1019
        %v1036 = vtanh.pop %v1020
        %v1037 = vtanh.pop %v1021
        %v1038 = vtanh.pop %v1022
        %v1039 = vtanh.pop %v1023
        %v1040 = vtanh.pop %v1024
        %v1041 = vtanh.pop %v1025
        %v1042 = vmul.f32 %v1026, 0.5
        %v1043 = vmul.f32 %v1027, 0.5
        %v1044 = vmul.f32 %v1028, 0.5
        %v1045 = vmul.f32 %v1029, 0.5
        %v1046 = vmul.f32 %v1030, 0.5
        %v1047 = vmul.f32 %v1031, 0.5
        %v1048 = vmul.f32 %v1032, 0.5
        %v1049 = vmul.f32 %v1033, 0.5
        %v1050 = vadd.f32 %v1042, 0.5
        %v1051 = vadd.f32 %v1043, 0.5
        %v1052 = vadd.f32 %v1044, 0.5
        %v1053 = vadd.f32 %v1045, 0.5
        %v1054 = vadd.f32 %v1046, 0.5
        %v1055 = vadd.f32 %v1047, 0.5
        %v1056 = vadd.f32 %v1048, 0.5
        %v1057 = vadd.f32 %v1049, 0.5
        %v1058 = vsub.f32 %v1034, %v871
        %v1059 = vsub.f32 %v1035, %v872
        %v1060 = vsub.f32 %v1036, %v873
        %v1061 = vsub.f32 %v1037, %v874
        %v1062 = vsub.f32 %v1038, %v875
        %v1063 = vsub.f32 %v1039, %v876
        %v1064 = vsub.f32 %v1040, %v877
        %v1065 = vsub.f32 %v1041, %v878
        %v1066 = vmul.f32 %v1050, %v1058
        %v1067 = vmul.f32 %v1051, %v1059
        %v1068 = vmul.f32 %v1052, %v1060
        %v1069 = vmul.f32 %v1053, %v1061
        %v1070 = vmul.f32 %v1054, %v1062
        %v1071 = vmul.f32 %v1055, %v1063
        %v1072 = vmul.f32 %v1056, %v1064
        %v1073 = vmul.f32 %v1057, %v1065
        %v1074 = vadd.f32 %v871, %v1066
        %v1075 = vadd.f32 %v872, %v1067
        %v1076 = vadd.f32 %v873, %v1068
        %v1077 = vadd.f32 %v874, %v1069
        %v1078 = vadd.f32 %v875, %v1070
        %v1079 = vadd.f32 %v876, %v1071
        %v1080 = vadd.f32 %v877, %v1072
        %v1081 = vadd.f32 %v878, %v1073
        %s1082 = sld [smem:[#allocation3 + $0x1]]
        %v1083 = vstv %s1082
        %v1084 = vmul.f32 %v1083, %v1074
        %v1085 = vmul.f32 %v1083, %v1075
        %v1086 = vmul.f32 %v1083, %v1076
        %v1087 = vmul.f32 %v1083, %v1077
        %v1088 = vmul.f32 %v1083, %v1078
        %v1089 = vmul.f32 %v1083, %v1079
        %v1090 = vmul.f32 %v1083, %v1080
        %v1091 = vmul.f32 %v1083, %v1081
        %v1092 = vadd.f32 %v889, %v1084
        %v1093 = vadd.f32 %v890, %v1085
        %v1094 = vadd.f32 %v891, %v1086
        %v1095 = vadd.f32 %v892, %v1087
        %v1096 = vadd.f32 %v893, %v1088
        %v1097 = vadd.f32 %v894, %v1089
        %v1098 = vadd.f32 %v895, %v1090
        %v1099 = vadd.f32 %v896, %v1091
        %1100 = vmatprep.subr.mxu0 0.0
        %1101 = vmatpush1.msra.mxu0 0.0
        %1102 = vmatprep.subr.mxu0 0.0
        %1103 = vmatpush1.msra.mxu0 0.0
        %1104 = vmatprep.subr.mxu0 0.0
        %1105 = vmatpush1.msra.mxu0 0.0
        %1106 = vmatprep.subr.mxu0 0.0
        %1107 = vmatpush1.msra.mxu0 0.0
        %1108 = vmatprep.subr.mxu0 0.0
        %1109 = vmatpush1.msra.mxu0 0.0
        %1110 = vmatprep.subr.mxu0 0.0
        %1111 = vmatpush1.msra.mxu0 0.0
        %1112 = vmatprep.subr.mxu0 0.0
        %1113 = vmatpush1.msra.mxu0 0.0
        %1114 = vmatprep.subr.mxu0 0.0
        %1115 = vmatpush1.msra.mxu0 0.0
        %1116 = vmatprep.subr.mxu0 0.0
        %1117 = vmatpush1.msra.mxu0 0.0
        %1118 = vmatprep.subr.mxu0 0.0
        %1119 = vmatpush1.msra.mxu0 0.0
        %1120 = vmatprep.subr.mxu0 0.0
        %1121 = vmatpush1.msra.mxu0 0.0
        %1122 = vmatprep.subr.mxu0 0.0
        %1123 = vmatpush1.msra.mxu0 0.0
        %1124 = vmatprep.subr.mxu0 %v1081
        %1125 = vmatpush1.msra.mxu0 %v1080
        %1126 = vmatprep.subr.mxu0 %v1079
        %1127 = vmatpush1.msra.mxu0 %v1078
        %1128 = vmatprep.subr.mxu0 %v1077
        %1129 = vmatpush1.msra.mxu0 %v1076
        %1130 = vmatprep.subr.mxu0 %v1075
        %1131 = vmatpush1.msra.mxu0 %v1074
        %1132 = vmatprep.subr.mxu0 0.0
        %1133 = vmatpush2.msra.mxu0 0.0
        %1134 = vmatprep.subr.mxu0 0.0
        %1135 = vmatpush2.msra.mxu0 0.0
        %1136 = vmatprep.subr.mxu0 0.0
        %1137 = vmatpush2.msra.mxu0 0.0
        %1138 = vmatprep.subr.mxu0 0.0
        %1139 = vmatpush2.msra.mxu0 0.0
        %1140 = vmatprep.subr.mxu0 0.0
        %1141 = vmatpush2.msra.mxu0 0.0
        %1142 = vmatprep.subr.mxu0 0.0
        %1143 = vmatpush2.msra.mxu0 0.0
        %1144 = vmatprep.subr.mxu0 0.0
        %1145 = vmatpush2.msra.mxu0 0.0
        %1146 = vmatprep.subr.mxu0 0.0
        %1147 = vmatpush2.msra.mxu0 0.0
        %1148 = vmatprep.subr.mxu0 0.0
        %1149 = vmatpush2.msra.mxu0 0.0
        %1150 = vmatprep.subr.mxu0 0.0
        %1151 = vmatpush2.msra.mxu0 0.0
        %1152 = vmatprep.subr.mxu0 0.0
        %1153 = vmatpush2.msra.mxu0 0.0
        %1154 = vmatprep.subr.mxu0 0.0
        %1155 = vmatpush2.msra.mxu0 0.0
        %1156 = vmatprep.subr.mxu0 0.0
        %1157 = vmatpush2.msra.mxu0 0.0
        %1158 = vmatprep.subr.mxu0 0.0
        %1159 = vmatpush2.msra.mxu0 0.0
        %1160 = vmatprep.subr.mxu0 0.0
        %1161 = vmatpush2.msra.mxu0 0.0
        %1162 = vmatprep.subr.mxu0 0.0
        %1163 = vmatpush2.msra.mxu0 0.0
        %1164 = vmatprep.mubr.f32.mxu0 0.0
        %1165 = vmatmul.mubr.f32.gmra.mxu0 %v671
        %v1166 = vpop.f32.mrf.mxu0
        %v1167 = vadd.f32 0.0, %v1166
        %v1168 = vpop.f32.mrf.mxu0
        %v1169 = vadd.f32 0.0, %v1168
        %1170 = vmatprep.mubr.f32.mxu0 0.0
        %1171 = vmatmul.mubr.f32.gmra.mxu0 %v674
        %v1172 = vpop.f32.mrf.mxu0
        %v1173 = vadd.f32 0.0, %v1172
        %v1174 = vpop.f32.mrf.mxu0
        %v1175 = vadd.f32 0.0, %v1174
        %1176 = vmatprep.mubr.f32.mxu0 0.0
        %1177 = vmatmul.mubr.f32.gmra.mxu0 %v677
        %v1178 = vpop.f32.mrf.mxu0
        %v1179 = vadd.f32 0.0, %v1178
        %v1180 = vpop.f32.mrf.mxu0
        %v1181 = vadd.f32 0.0, %v1180
        %1182 = vmatprep.mubr.f32.mxu0 0.0
        %1183 = vmatmul.mubr.f32.gmra.mxu0 %v680
        %v1184 = vpop.f32.mrf.mxu0
        %v1185 = vadd.f32 0.0, %v1184
        %v1186 = vpop.f32.mrf.mxu0
        %v1187 = vadd.f32 0.0, %v1186
        %1188 = vmatprep.mubr.f32.mxu0 0.0
        %1189 = vmatmul.mubr.f32.gmra.mxu0 %v683
        %v1190 = vpop.f32.mrf.mxu0
        %v1191 = vadd.f32 0.0, %v1190
        %v1192 = vpop.f32.mrf.mxu0
        %v1193 = vadd.f32 0.0, %v1192
        %1194 = vmatprep.mubr.f32.mxu0 0.0
        %1195 = vmatmul.mubr.f32.gmra.mxu0 %v686
        %v1196 = vpop.f32.mrf.mxu0
        %v1197 = vadd.f32 0.0, %v1196
        %v1198 = vpop.f32.mrf.mxu0
        %v1199 = vadd.f32 0.0, %v1198
        %1200 = vmatprep.mubr.f32.mxu0 0.0
        %1201 = vmatmul.mubr.f32.gmra.mxu0 %v689
        %v1202 = vpop.f32.mrf.mxu0
        %v1203 = vadd.f32 0.0, %v1202
        %v1204 = vpop.f32.mrf.mxu0
        %v1205 = vadd.f32 0.0, %v1204
        %1206 = vmatprep.mubr.f32.mxu0 0.0
        %1207 = vmatmul.mubr.f32.gmra.mxu0 %v692
        %v1208 = vpop.f32.mrf.mxu0
        %v1209 = vadd.f32 0.0, %v1208
        %v1210 = vpop.f32.mrf.mxu0
        %v1211 = vadd.f32 0.0, %v1210
        %1212 = vdwg.mxu0
        %v1213 = vadd.f32 %v616, %v1167
        %v1214 = vadd.f32 %v618, %v1169
        %v1215 = vadd.f32 %v622, %v1173
        %v1216 = vadd.f32 %v624, %v1175
        %v1217 = vadd.f32 %v628, %v1179
        %v1218 = vadd.f32 %v630, %v1181
        %v1219 = vadd.f32 %v634, %v1185
        %v1220 = vadd.f32 %v636, %v1187
        %v1221 = vadd.f32 %v640, %v1191
        %v1222 = vadd.f32 %v642, %v1193
        %v1223 = vadd.f32 %v646, %v1197
        %v1224 = vadd.f32 %v648, %v1199
        %v1225 = vadd.f32 %v652, %v1203
        %v1226 = vadd.f32 %v654, %v1205
        %v1227 = vadd.f32 %v658, %v1209
        %v1228 = vadd.f32 %v660, %v1211
        %v1229 = vtanh.pop %v1213
        %v1230 = vtanh.pop %v1214
        %v1231 = vtanh.pop %v1215
        %v1232 = vtanh.pop %v1216
        %v1233 = vtanh.pop %v1217
        %v1234 = vtanh.pop %v1218
        %v1235 = vtanh.pop %v1219
        %v1236 = vtanh.pop %v1220
        %v1237 = vtanh.pop %v1221
        %v1238 = vtanh.pop %v1222
        %v1239 = vtanh.pop %v1223
        %v1240 = vtanh.pop %v1224
        %v1241 = vtanh.pop %v1225
        %v1242 = vtanh.pop %v1226
        %v1243 = vtanh.pop %v1227
        %v1244 = vtanh.pop %v1228
        %v1245 = vmul.f32 %v1229, 0.5
        %v1246 = vmul.f32 %v1230, 0.5
        %v1247 = vmul.f32 %v1231, 0.5
        %v1248 = vmul.f32 %v1232, 0.5
        %v1249 = vmul.f32 %v1233, 0.5
        %v1250 = vmul.f32 %v1234, 0.5
        %v1251 = vmul.f32 %v1235, 0.5
        %v1252 = vmul.f32 %v1236, 0.5
        %v1253 = vadd.f32 %v1245, 0.5
        %v1254 = vadd.f32 %v1246, 0.5
        %v1255 = vadd.f32 %v1247, 0.5
        %v1256 = vadd.f32 %v1248, 0.5
        %v1257 = vadd.f32 %v1249, 0.5
        %v1258 = vadd.f32 %v1250, 0.5
        %v1259 = vadd.f32 %v1251, 0.5
        %v1260 = vadd.f32 %v1252, 0.5
        %v1261 = vsub.f32 %v1237, %v1074
        %v1262 = vsub.f32 %v1238, %v1075
        %v1263 = vsub.f32 %v1239, %v1076
        %v1264 = vsub.f32 %v1240, %v1077
        %v1265 = vsub.f32 %v1241, %v1078
        %v1266 = vsub.f32 %v1242, %v1079
        %v1267 = vsub.f32 %v1243, %v1080
        %v1268 = vsub.f32 %v1244, %v1081
        %v1269 = vmul.f32 %v1253, %v1261
        %v1270 = vmul.f32 %v1254, %v1262
        %v1271 = vmul.f32 %v1255, %v1263
        %v1272 = vmul.f32 %v1256, %v1264
        %v1273 = vmul.f32 %v1257, %v1265
        %v1274 = vmul.f32 %v1258, %v1266
        %v1275 = vmul.f32 %v1259, %v1267
        %v1276 = vmul.f32 %v1260, %v1268
        %v1277 = vadd.f32 %v1074, %v1269
        %v1278 = vadd.f32 %v1075, %v1270
        %v1279 = vadd.f32 %v1076, %v1271
        %v1280 = vadd.f32 %v1077, %v1272
        %v1281 = vadd.f32 %v1078, %v1273
        %v1282 = vadd.f32 %v1079, %v1274
        %v1283 = vadd.f32 %v1080, %v1275
        %v1284 = vadd.f32 %v1081, %v1276
        %s1285 = sld [smem:[#allocation3 + $0x2]]
        %v1286 = vstv %s1285
        %v1287 = vmul.f32 %v1286, %v1277
        %v1288 = vmul.f32 %v1286, %v1278
        %v1289 = vmul.f32 %v1286, %v1279
        %v1290 = vmul.f32 %v1286, %v1280
        %v1291 = vmul.f32 %v1286, %v1281
        %v1292 = vmul.f32 %v1286, %v1282
        %v1293 = vmul.f32 %v1286, %v1283
        %v1294 = vmul.f32 %v1286, %v1284
        %v1295 = vadd.f32 %v1092, %v1287
        %v1296 = vadd.f32 %v1093, %v1288
        %v1297 = vadd.f32 %v1094, %v1289
        %v1298 = vadd.f32 %v1095, %v1290
        %v1299 = vadd.f32 %v1096, %v1291
        %v1300 = vadd.f32 %v1097, %v1292
        %v1301 = vadd.f32 %v1098, %v1293
        %v1302 = vadd.f32 %v1099, %v1294
        %1303 = vmatprep.subr.mxu0 0.0
        %1304 = vmatpush1.msra.mxu0 0.0
        %1305 = vmatprep.subr.mxu0 0.0
        %1306 = vmatpush1.msra.mxu0 0.0
        %1307 = vmatprep.subr.mxu0 0.0
        %1308 = vmatpush1.msra.mxu0 0.0
        %1309 = vmatprep.subr.mxu0 0.0
        %1310 = vmatpush1.msra.mxu0 0.0
        %1311 = vmatprep.subr.mxu0 0.0
        %1312 = vmatpush1.msra.mxu0 0.0
        %1313 = vmatprep.subr.mxu0 0.0
        %1314 = vmatpush1.msra.mxu0 0.0
        %1315 = vmatprep.subr.mxu0 0.0
        %1316 = vmatpush1.msra.mxu0 0.0
        %1317 = vmatprep.subr.mxu0 0.0
        %1318 = vmatpush1.msra.mxu0 0.0
        %1319 = vmatprep.subr.mxu0 0.0
        %1320 = vmatpush1.msra.mxu0 0.0
        %1321 = vmatprep.subr.mxu0 0.0
        %1322 = vmatpush1.msra.mxu0 0.0
        %1323 = vmatprep.subr.mxu0 0.0
        %1324 = vmatpush1.msra.mxu0 0.0
        %1325 = vmatprep.subr.mxu0 0.0
        %1326 = vmatpush1.msra.mxu0 0.0
        %1327 = vmatprep.subr.mxu0 %v1284
        %1328 = vmatpush1.msra.mxu0 %v1283
        %1329 = vmatprep.subr.mxu0 %v1282
        %1330 = vmatpush1.msra.mxu0 %v1281
        %1331 = vmatprep.subr.mxu0 %v1280
        %1332 = vmatpush1.msra.mxu0 %v1279
        %1333 = vmatprep.subr.mxu0 %v1278
        %1334 = vmatpush1.msra.mxu0 %v1277
        %1335 = vmatprep.subr.mxu0 0.0
        %1336 = vmatpush2.msra.mxu0 0.0
        %1337 = vmatprep.subr.mxu0 0.0
        %1338 = vmatpush2.msra.mxu0 0.0
        %1339 = vmatprep.subr.mxu0 0.0
        %1340 = vmatpush2.msra.mxu0 0.0
        %1341 = vmatprep.subr.mxu0 0.0
        %1342 = vmatpush2.msra.mxu0 0.0
        %1343 = vmatprep.subr.mxu0 0.0
        %1344 = vmatpush2.msra.mxu0 0.0
        %1345 = vmatprep.subr.mxu0 0.0
        %1346 = vmatpush2.msra.mxu0 0.0
        %1347 = vmatprep.subr.mxu0 0.0
        %1348 = vmatpush2.msra.mxu0 0.0
        %1349 = vmatprep.subr.mxu0 0.0
        %1350 = vmatpush2.msra.mxu0 0.0
        %1351 = vmatprep.subr.mxu0 0.0
        %1352 = vmatpush2.msra.mxu0 0.0
        %1353 = vmatprep.subr.mxu0 0.0
        %1354 = vmatpush2.msra.mxu0 0.0
        %1355 = vmatprep.subr.mxu0 0.0
        %1356 = vmatpush2.msra.mxu0 0.0
        %1357 = vmatprep.subr.mxu0 0.0
        %1358 = vmatpush2.msra.mxu0 0.0
        %1359 = vmatprep.subr.mxu0 0.0
        %1360 = vmatpush2.msra.mxu0 0.0
        %1361 = vmatprep.subr.mxu0 0.0
        %1362 = vmatpush2.msra.mxu0 0.0
        %1363 = vmatprep.subr.mxu0 0.0
        %1364 = vmatpush2.msra.mxu0 0.0
        %1365 = vmatprep.subr.mxu0 0.0
        %1366 = vmatpush2.msra.mxu0 0.0
        %1367 = vmatprep.mubr.f32.mxu0 0.0
        %1368 = vmatmul.mubr.f32.gmra.mxu0 %v671
        %v1369 = vpop.f32.mrf.mxu0
        %v1370 = vadd.f32 0.0, %v1369
        %v1371 = vpop.f32.mrf.mxu0
        %v1372 = vadd.f32 0.0, %v1371
        %1373 = vmatprep.mubr.f32.mxu0 0.0
        %1374 = vmatmul.mubr.f32.gmra.mxu0 %v674
        %v1375 = vpop.f32.mrf.mxu0
        %v1376 = vadd.f32 0.0, %v1375
        %v1377 = vpop.f32.mrf.mxu0
        %v1378 = vadd.f32 0.0, %v1377
        %1379 = vmatprep.mubr.f32.mxu0 0.0
        %1380 = vmatmul.mubr.f32.gmra.mxu0 %v677
        %v1381 = vpop.f32.mrf.mxu0
        %v1382 = vadd.f32 0.0, %v1381
        %v1383 = vpop.f32.mrf.mxu0
        %v1384 = vadd.f32 0.0, %v1383
        %1385 = vmatprep.mubr.f32.mxu0 0.0
        %1386 = vmatmul.mubr.f32.gmra.mxu0 %v680
        %v1387 = vpop.f32.mrf.mxu0
        %v1388 = vadd.f32 0.0, %v1387
        %v1389 = vpop.f32.mrf.mxu0
        %v1390 = vadd.f32 0.0, %v1389
        %1391 = vmatprep.mubr.f32.mxu0 0.0
        %1392 = vmatmul.mubr.f32.gmra.mxu0 %v683
        %v1393 = vpop.f32.mrf.mxu0
        %v1394 = vadd.f32 0.0, %v1393
        %v1395 = vpop.f32.mrf.mxu0
        %v1396 = vadd.f32 0.0, %v1395
        %1397 = vmatprep.mubr.f32.mxu0 0.0
        %1398 = vmatmul.mubr.f32.gmra.mxu0 %v686
        %v1399 = vpop.f32.mrf.mxu0
        %v1400 = vadd.f32 0.0, %v1399
        %v1401 = vpop.f32.mrf.mxu0
        %v1402 = vadd.f32 0.0, %v1401
        %1403 = vmatprep.mubr.f32.mxu0 0.0
        %1404 = vmatmul.mubr.f32.gmra.mxu0 %v689
        %v1405 = vpop.f32.mrf.mxu0
        %v1406 = vadd.f32 0.0, %v1405
        %v1407 = vpop.f32.mrf.mxu0
        %v1408 = vadd.f32 0.0, %v1407
        %1409 = vmatprep.mubr.f32.mxu0 0.0
        %1410 = vmatmul.mubr.f32.gmra.mxu0 %v692
        %v1411 = vpop.f32.mrf.mxu0
        %v1412 = vadd.f32 0.0, %v1411
        %v1413 = vpop.f32.mrf.mxu0
        %v1414 = vadd.f32 0.0, %v1413
        %1415 = vdwg.mxu0
        %v1416 = vadd.f32 %v616, %v1370
        %v1417 = vadd.f32 %v618, %v1372
        %v1418 = vadd.f32 %v622, %v1376
        %v1419 = vadd.f32 %v624, %v1378
        %v1420 = vadd.f32 %v628, %v1382
        %v1421 = vadd.f32 %v630, %v1384
        %v1422 = vadd.f32 %v634, %v1388
        %v1423 = vadd.f32 %v636, %v1390
        %v1424 = vadd.f32 %v640, %v1394
        %v1425 = vadd.f32 %v642, %v1396
        %v1426 = vadd.f32 %v646, %v1400
        %v1427 = vadd.f32 %v648, %v1402
        %v1428 = vadd.f32 %v652, %v1406
        %v1429 = vadd.f32 %v654, %v1408
        %v1430 = vadd.f32 %v658, %v1412
        %v1431 = vadd.f32 %v660, %v1414
        %v1432 = vtanh.pop %v1416
        %v1433 = vtanh.pop %v1417
        %v1434 = vtanh.pop %v1418
        %v1435 = vtanh.pop %v1419
        %v1436 = vtanh.pop %v1420
        %v1437 = vtanh.pop %v1421
        %v1438 = vtanh.pop %v1422
        %v1439 = vtanh.pop %v1423
        %v1440 = vtanh.pop %v1424
        %v1441 = vtanh.pop %v1425
        %v1442 = vtanh.pop %v1426
        %v1443 = vtanh.pop %v1427
        %v1444 = vtanh.pop %v1428
        %v1445 = vtanh.pop %v1429
        %v1446 = vtanh.pop %v1430
        %v1447 = vtanh.pop %v1431
        %v1448 = vmul.f32 %v1432, 0.5
        %v1449 = vmul.f32 %v1433, 0.5
        %v1450 = vmul.f32 %v1434, 0.5
        %v1451 = vmul.f32 %v1435, 0.5
        %v1452 = vmul.f32 %v1436, 0.5
        %v1453 = vmul.f32 %v1437, 0.5
        %v1454 = vmul.f32 %v1438, 0.5
        %v1455 = vmul.f32 %v1439, 0.5
        %v1456 = vadd.f32 %v1448, 0.5
        %v1457 = vadd.f32 %v1449, 0.5
        %v1458 = vadd.f32 %v1450, 0.5
        %v1459 = vadd.f32 %v1451, 0.5
        %v1460 = vadd.f32 %v1452, 0.5
        %v1461 = vadd.f32 %v1453, 0.5
        %v1462 = vadd.f32 %v1454, 0.5
        %v1463 = vadd.f32 %v1455, 0.5
        %v1464 = vsub.f32 %v1440, %v1277
        %v1465 = vsub.f32 %v1441, %v1278
        %v1466 = vsub.f32 %v1442, %v1279
        %v1467 = vsub.f32 %v1443, %v1280
        %v1468 = vsub.f32 %v1444, %v1281
        %v1469 = vsub.f32 %v1445, %v1282
        %v1470 = vsub.f32 %v1446, %v1283
        %v1471 = vsub.f32 %v1447, %v1284
        %v1472 = vmul.f32 %v1456, %v1464
        %v1473 = vmul.f32 %v1457, %v1465
        %v1474 = vmul.f32 %v1458, %v1466
        %v1475 = vmul.f32 %v1459, %v1467
        %v1476 = vmul.f32 %v1460, %v1468
        %v1477 = vmul.f32 %v1461, %v1469
        %v1478 = vmul.f32 %v1462, %v1470
        %v1479 = vmul.f32 %v1463, %v1471
        %v1480 = vadd.f32 %v1277, %v1472
        %v1481 = vadd.f32 %v1278, %v1473
        %v1482 = vadd.f32 %v1279, %v1474
        %v1483 = vadd.f32 %v1280, %v1475
        %v1484 = vadd.f32 %v1281, %v1476
        %v1485 = vadd.f32 %v1282, %v1477
        %v1486 = vadd.f32 %v1283, %v1478
        %v1487 = vadd.f32 %v1284, %v1479
        %s1488 = sld [smem:[#allocation3 + $0x3]]
        %v1489 = vstv %s1488
        %v1490 = vmul.f32 %v1489, %v1480
        %v1491 = vmul.f32 %v1489, %v1481
        %v1492 = vmul.f32 %v1489, %v1482
        %v1493 = vmul.f32 %v1489, %v1483
        %v1494 = vmul.f32 %v1489, %v1484
        %v1495 = vmul.f32 %v1489, %v1485
        %v1496 = vmul.f32 %v1489, %v1486
        %v1497 = vmul.f32 %v1489, %v1487
        %v1498 = vadd.f32 %v1295, %v1490
        %v1499 = vadd.f32 %v1296, %v1491
        %v1500 = vadd.f32 %v1297, %v1492
        %v1501 = vadd.f32 %v1298, %v1493
        %v1502 = vadd.f32 %v1299, %v1494
        %v1503 = vadd.f32 %v1300, %v1495
        %v1504 = vadd.f32 %v1301, %v1496
        %v1505 = vadd.f32 %v1302, %v1497
        %1506 = vmatprep.subr.mxu0 0.0
        %1507 = vmatpush1.msra.mxu0 0.0
        %1508 = vmatprep.subr.mxu0 0.0
        %1509 = vmatpush1.msra.mxu0 0.0
        %1510 = vmatprep.subr.mxu0 0.0
        %1511 = vmatpush1.msra.mxu0 0.0
        %1512 = vmatprep.subr.mxu0 0.0
        %1513 = vmatpush1.msra.mxu0 0.0
        %1514 = vmatprep.subr.mxu0 0.0
        %1515 = vmatpush1.msra.mxu0 0.0
        %1516 = vmatprep.subr.mxu0 0.0
        %1517 = vmatpush1.msra.mxu0 0.0
        %1518 = vmatprep.subr.mxu0 0.0
        %1519 = vmatpush1.msra.mxu0 0.0
        %1520 = vmatprep.subr.mxu0 0.0
        %1521 = vmatpush1.msra.mxu0 0.0
        %1522 = vmatprep.subr.mxu0 0.0
        %1523 = vmatpush1.msra.mxu0 0.0
        %1524 = vmatprep.subr.mxu0 0.0
        %1525 = vmatpush1.msra.mxu0 0.0
        %1526 = vmatprep.subr.mxu0 0.0
        %1527 = vmatpush1.msra.mxu0 0.0
        %1528 = vmatprep.subr.mxu0 0.0
        %1529 = vmatpush1.msra.mxu0 0.0
        %1530 = vmatprep.subr.mxu0 %v1487
        %1531 = vmatpush1.msra.mxu0 %v1486
        %1532 = vmatprep.subr.mxu0 %v1485
        %1533 = vmatpush1.msra.mxu0 %v1484
        %1534 = vmatprep.subr.mxu0 %v1483
        %1535 = vmatpush1.msra.mxu0 %v1482
        %1536 = vmatprep.subr.mxu0 %v1481
        %1537 = vmatpush1.msra.mxu0 %v1480
        %1538 = vmatprep.subr.mxu0 0.0
        %1539 = vmatpush2.msra.mxu0 0.0
        %1540 = vmatprep.subr.mxu0 0.0
        %1541 = vmatpush2.msra.mxu0 0.0
        %1542 = vmatprep.subr.mxu0 0.0
        %1543 = vmatpush2.msra.mxu0 0.0
        %1544 = vmatprep.subr.mxu0 0.0
        %1545 = vmatpush2.msra.mxu0 0.0
        %1546 = vmatprep.subr.mxu0 0.0
        %1547 = vmatpush2.msra.mxu0 0.0
        %1548 = vmatprep.subr.mxu0 0.0
        %1549 = vmatpush2.msra.mxu0 0.0
        %1550 = vmatprep.subr.mxu0 0.0
        %1551 = vmatpush2.msra.mxu0 0.0
        %1552 = vmatprep.subr.mxu0 0.0
        %1553 = vmatpush2.msra.mxu0 0.0
        %1554 = vmatprep.subr.mxu0 0.0
        %1555 = vmatpush2.msra.mxu0 0.0
        %1556 = vmatprep.subr.mxu0 0.0
        %1557 = vmatpush2.msra.mxu0 0.0
        %1558 = vmatprep.subr.mxu0 0.0
        %1559 = vmatpush2.msra.mxu0 0.0
        %1560 = vmatprep.subr.mxu0 0.0
        %1561 = vmatpush2.msra.mxu0 0.0
        %1562 = vmatprep.subr.mxu0 0.0
        %1563 = vmatpush2.msra.mxu0 0.0
        %1564 = vmatprep.subr.mxu0 0.0
        %1565 = vmatpush2.msra.mxu0 0.0
        %1566 = vmatprep.subr.mxu0 0.0
        %1567 = vmatpush2.msra.mxu0 0.0
        %1568 = vmatprep.subr.mxu0 0.0
        %1569 = vmatpush2.msra.mxu0 0.0
        %1570 = vmatprep.mubr.f32.mxu0 0.0
        %1571 = vmatmul.mubr.f32.gmra.mxu0 %v671
        %v1572 = vpop.f32.mrf.mxu0
        %v1573 = vadd.f32 0.0, %v1572
        %v1574 = vpop.f32.mrf.mxu0
        %v1575 = vadd.f32 0.0, %v1574
        %1576 = vmatprep.mubr.f32.mxu0 0.0
        %1577 = vmatmul.mubr.f32.gmra.mxu0 %v674
        %v1578 = vpop.f32.mrf.mxu0
        %v1579 = vadd.f32 0.0, %v1578
        %v1580 = vpop.f32.mrf.mxu0
        %v1581 = vadd.f32 0.0, %v1580
        %1582 = vmatprep.mubr.f32.mxu0 0.0
        %1583 = vmatmul.mubr.f32.gmra.mxu0 %v677
        %v1584 = vpop.f32.mrf.mxu0
        %v1585 = vadd.f32 0.0, %v1584
        %v1586 = vpop.f32.mrf.mxu0
        %v1587 = vadd.f32 0.0, %v1586
        %1588 = vmatprep.mubr.f32.mxu0 0.0
        %1589 = vmatmul.mubr.f32.gmra.mxu0 %v680
        %v1590 = vpop.f32.mrf.mxu0
        %v1591 = vadd.f32 0.0, %v1590
        %v1592 = vpop.f32.mrf.mxu0
        %v1593 = vadd.f32 0.0, %v1592
        %1594 = vmatprep.mubr.f32.mxu0 0.0
        %1595 = vmatmul.mubr.f32.gmra.mxu0 %v683
        %v1596 = vpop.f32.mrf.mxu0
        %v1597 = vadd.f32 0.0, %v1596
        %v1598 = vpop.f32.mrf.mxu0
        %v1599 = vadd.f32 0.0, %v1598
        %1600 = vmatprep.mubr.f32.mxu0 0.0
        %1601 = vmatmul.mubr.f32.gmra.mxu0 %v686
        %v1602 = vpop.f32.mrf.mxu0
        %v1603 = vadd.f32 0.0, %v1602
        %v1604 = vpop.f32.mrf.mxu0
        %v1605 = vadd.f32 0.0, %v1604
        %1606 = vmatprep.mubr.f32.mxu0 0.0
        %1607 = vmatmul.mubr.f32.gmra.mxu0 %v689
        %v1608 = vpop.f32.mrf.mxu0
        %v1609 = vadd.f32 0.0, %v1608
        %v1610 = vpop.f32.mrf.mxu0
        %v1611 = vadd.f32 0.0, %v1610
        %1612 = vmatprep.mubr.f32.mxu0 0.0
        %1613 = vmatmul.mubr.f32.gmra.mxu0 %v692
        %v1614 = vpop.f32.mrf.mxu0
        %v1615 = vadd.f32 0.0, %v1614
        %v1616 = vpop.f32.mrf.mxu0
        %v1617 = vadd.f32 0.0, %v1616
        %1618 = vdwg.mxu0
        %v1619 = vadd.f32 %v616, %v1573
        %v1620 = vadd.f32 %v618, %v1575
        %v1621 = vadd.f32 %v622, %v1579
        %v1622 = vadd.f32 %v624, %v1581
        %v1623 = vadd.f32 %v628, %v1585
        %v1624 = vadd.f32 %v630, %v1587
        %v1625 = vadd.f32 %v634, %v1591
        %v1626 = vadd.f32 %v636, %v1593
        %v1627 = vadd.f32 %v640, %v1597
        %v1628 = vadd.f32 %v642, %v1599
        %v1629 = vadd.f32 %v646, %v1603
        %v1630 = vadd.f32 %v648, %v1605
        %v1631 = vadd.f32 %v652, %v1609
        %v1632 = vadd.f32 %v654, %v1611
        %v1633 = vadd.f32 %v658, %v1615
        %v1634 = vadd.f32 %v660, %v1617
        %v1635 = vtanh.pop %v1619
        %v1636 = vtanh.pop %v1620
        %v1637 = vtanh.pop %v1621
        %v1638 = vtanh.pop %v1622
        %v1639 = vtanh.pop %v1623
        %v1640 = vtanh.pop %v1624
        %v1641 = vtanh.pop %v1625
        %v1642 = vtanh.pop %v1626
        %v1643 = vtanh.pop %v1627
        %v1644 = vtanh.pop %v1628
        %v1645 = vtanh.pop %v1629
        %v1646 = vtanh.pop %v1630
        %v1647 = vtanh.pop %v1631
        %v1648 = vtanh.pop %v1632
        %v1649 = vtanh.pop %v1633
        %v1650 = vtanh.pop %v1634
        %v1651 = vmul.f32 %v1635, 0.5
        %v1652 = vmul.f32 %v1636, 0.5
        %v1653 = vmul.f32 %v1637, 0.5
        %v1654 = vmul.f32 %v1638, 0.5
        %v1655 = vmul.f32 %v1639, 0.5
        %v1656 = vmul.f32 %v1640, 0.5
        %v1657 = vmul.f32 %v1641, 0.5
        %v1658 = vmul.f32 %v1642, 0.5
        %v1659 = vadd.f32 %v1651, 0.5
        %v1660 = vadd.f32 %v1652, 0.5
        %v1661 = vadd.f32 %v1653, 0.5
        %v1662 = vadd.f32 %v1654, 0.5
        %v1663 = vadd.f32 %v1655, 0.5
        %v1664 = vadd.f32 %v1656, 0.5
        %v1665 = vadd.f32 %v1657, 0.5
        %v1666 = vadd.f32 %v1658, 0.5
        %v1667 = vsub.f32 %v1643, %v1480
        %v1668 = vsub.f32 %v1644, %v1481
        %v1669 = vsub.f32 %v1645, %v1482
        %v1670 = vsub.f32 %v1646, %v1483
        %v1671 = vsub.f32 %v1647, %v1484
        %v1672 = vsub.f32 %v1648, %v1485
        %v1673 = vsub.f32 %v1649, %v1486
        %v1674 = vsub.f32 %v1650, %v1487
        %v1675 = vmul.f32 %v1659, %v1667
        %v1676 = vmul.f32 %v1660, %v1668
        %v1677 = vmul.f32 %v1661, %v1669
        %v1678 = vmul.f32 %v1662, %v1670
        %v1679 = vmul.f32 %v1663, %v1671
        %v1680 = vmul.f32 %v1664, %v1672
        %v1681 = vmul.f32 %v1665, %v1673
        %v1682 = vmul.f32 %v1666, %v1674
        %v1683 = vadd.f32 %v1480, %v1675
        %v1684 = vadd.f32 %v1481, %v1676
        %v1685 = vadd.f32 %v1482, %v1677
        %v1686 = vadd.f32 %v1483, %v1678
        %v1687 = vadd.f32 %v1484, %v1679
        %v1688 = vadd.f32 %v1485, %v1680
        %v1689 = vadd.f32 %v1486, %v1681
        %v1690 = vadd.f32 %v1487, %v1682
        %s1691 = sld [smem:[#allocation3 + $0x4]]
        %v1692 = vstv %s1691
        %v1693 = vmul.f32 %v1692, %v1683
        %v1694 = vmul.f32 %v1692, %v1684
        %v1695 = vmul.f32 %v1692, %v1685
        %v1696 = vmul.f32 %v1692, %v1686
        %v1697 = vmul.f32 %v1692, %v1687
        %v1698 = vmul.f32 %v1692, %v1688
        %v1699 = vmul.f32 %v1692, %v1689
        %v1700 = vmul.f32 %v1692, %v1690
        %v1701 = vadd.f32 %v1498, %v1693
        %v1702 = vadd.f32 %v1499, %v1694
        %v1703 = vadd.f32 %v1500, %v1695
        %v1704 = vadd.f32 %v1501, %v1696
        %v1705 = vadd.f32 %v1502, %v1697
        %v1706 = vadd.f32 %v1503, %v1698
        %v1707 = vadd.f32 %v1504, %v1699
        %v1708 = vadd.f32 %v1505, %v1700
        %1709 = vmatprep.subr.mxu0 0.0
        %1710 = vmatpush1.msra.mxu0 0.0
        %1711 = vmatprep.subr.mxu0 0.0
        %1712 = vmatpush1.msra.mxu0 0.0
        %1713 = vmatprep.subr.mxu0 0.0
        %1714 = vmatpush1.msra.mxu0 0.0
        %1715 = vmatprep.subr.mxu0 0.0
        %1716 = vmatpush1.msra.mxu0 0.0
        %1717 = vmatprep.subr.mxu0 0.0
        %1718 = vmatpush1.msra.mxu0 0.0
        %1719 = vmatprep.subr.mxu0 0.0
        %1720 = vmatpush1.msra.mxu0 0.0
        %1721 = vmatprep.subr.mxu0 0.0
        %1722 = vmatpush1.msra.mxu0 0.0
        %1723 = vmatprep.subr.mxu0 0.0
        %1724 = vmatpush1.msra.mxu0 0.0
        %1725 = vmatprep.subr.mxu0 0.0
        %1726 = vmatpush1.msra.mxu0 0.0
        %1727 = vmatprep.subr.mxu0 0.0
        %1728 = vmatpush1.msra.mxu0 0.0
        %1729 = vmatprep.subr.mxu0 0.0
        %1730 = vmatpush1.msra.mxu0 0.0
        %1731 = vmatprep.subr.mxu0 0.0
        %1732 = vmatpush1.msra.mxu0 0.0
        %1733 = vmatprep.subr.mxu0 %v1690
        %1734 = vmatpush1.msra.mxu0 %v1689
        %1735 = vmatprep.subr.mxu0 %v1688
        %1736 = vmatpush1.msra.mxu0 %v1687
        %1737 = vmatprep.subr.mxu0 %v1686
        %1738 = vmatpush1.msra.mxu0 %v1685
        %1739 = vmatprep.subr.mxu0 %v1684
        %1740 = vmatpush1.msra.mxu0 %v1683
        %1741 = vmatprep.subr.mxu0 0.0
        %1742 = vmatpush2.msra.mxu0 0.0
        %1743 = vmatprep.subr.mxu0 0.0
        %1744 = vmatpush2.msra.mxu0 0.0
        %1745 = vmatprep.subr.mxu0 0.0
        %1746 = vmatpush2.msra.mxu0 0.0
        %1747 = vmatprep.subr.mxu0 0.0
        %1748 = vmatpush2.msra.mxu0 0.0
        %1749 = vmatprep.subr.mxu0 0.0
        %1750 = vmatpush2.msra.mxu0 0.0
        %1751 = vmatprep.subr.mxu0 0.0
        %1752 = vmatpush2.msra.mxu0 0.0
        %1753 = vmatprep.subr.mxu0 0.0
        %1754 = vmatpush2.msra.mxu0 0.0
        %1755 = vmatprep.subr.mxu0 0.0
        %1756 = vmatpush2.msra.mxu0 0.0
        %1757 = vmatprep.subr.mxu0 0.0
        %1758 = vmatpush2.msra.mxu0 0.0
        %1759 = vmatprep.subr.mxu0 0.0
        %1760 = vmatpush2.msra.mxu0 0.0
        %1761 = vmatprep.subr.mxu0 0.0
        %1762 = vmatpush2.msra.mxu0 0.0
        %1763 = vmatprep.subr.mxu0 0.0
        %1764 = vmatpush2.msra.mxu0 0.0
        %1765 = vmatprep.subr.mxu0 0.0
        %1766 = vmatpush2.msra.mxu0 0.0
        %1767 = vmatprep.subr.mxu0 0.0
        %1768 = vmatpush2.msra.mxu0 0.0
        %1769 = vmatprep.subr.mxu0 0.0
        %1770 = vmatpush2.msra.mxu0 0.0
        %1771 = vmatprep.subr.mxu0 0.0
        %1772 = vmatpush2.msra.mxu0 0.0
        %1773 = vmatprep.mubr.f32.mxu0 0.0
        %1774 = vmatmul.mubr.f32.gmra.mxu0 %v671
        %v1775 = vpop.f32.mrf.mxu0
        %v1776 = vadd.f32 0.0, %v1775
        %v1777 = vpop.f32.mrf.mxu0
        %v1778 = vadd.f32 0.0, %v1777
        %1779 = vmatprep.mubr.f32.mxu0 0.0
        %1780 = vmatmul.mubr.f32.gmra.mxu0 %v674
        %v1781 = vpop.f32.mrf.mxu0
        %v1782 = vadd.f32 0.0, %v1781
        %v1783 = vpop.f32.mrf.mxu0
        %v1784 = vadd.f32 0.0, %v1783
        %1785 = vmatprep.mubr.f32.mxu0 0.0
        %1786 = vmatmul.mubr.f32.gmra.mxu0 %v677
        %v1787 = vpop.f32.mrf.mxu0
        %v1788 = vadd.f32 0.0, %v1787
        %v1789 = vpop.f32.mrf.mxu0
        %v1790 = vadd.f32 0.0, %v1789
        %1791 = vmatprep.mubr.f32.mxu0 0.0
        %1792 = vmatmul.mubr.f32.gmra.mxu0 %v680
        %v1793 = vpop.f32.mrf.mxu0
        %v1794 = vadd.f32 0.0, %v1793
        %v1795 = vpop.f32.mrf.mxu0
        %v1796 = vadd.f32 0.0, %v1795
        %1797 = vmatprep.mubr.f32.mxu0 0.0
        %1798 = vmatmul.mubr.f32.gmra.mxu0 %v683
        %v1799 = vpop.f32.mrf.mxu0
        %v1800 = vadd.f32 0.0, %v1799
        %v1801 = vpop.f32.mrf.mxu0
        %v1802 = vadd.f32 0.0, %v1801
        %1803 = vmatprep.mubr.f32.mxu0 0.0
        %1804 = vmatmul.mubr.f32.gmra.mxu0 %v686
        %v1805 = vpop.f32.mrf.mxu0
        %v1806 = vadd.f32 0.0, %v1805
        %v1807 = vpop.f32.mrf.mxu0
        %v1808 = vadd.f32 0.0, %v1807
        %1809 = vmatprep.mubr.f32.mxu0 0.0
        %1810 = vmatmul.mubr.f32.gmra.mxu0 %v689
        %v1811 = vpop.f32.mrf.mxu0
        %v1812 = vadd.f32 0.0, %v1811
        %v1813 = vpop.f32.mrf.mxu0
        %v1814 = vadd.f32 0.0, %v1813
        %1815 = vmatprep.mubr.f32.mxu0 0.0
        %1816 = vmatmul.mubr.f32.gmra.mxu0 %v692
        %v1817 = vpop.f32.mrf.mxu0
        %v1818 = vadd.f32 0.0, %v1817
        %v1819 = vpop.f32.mrf.mxu0
        %v1820 = vadd.f32 0.0, %v1819
        %1821 = vdwg.mxu0
        %v1822 = vadd.f32 %v616, %v1776
        %v1823 = vadd.f32 %v618, %v1778
        %v1824 = vadd.f32 %v622, %v1782
        %v1825 = vadd.f32 %v624, %v1784
        %v1826 = vadd.f32 %v628, %v1788
        %v1827 = vadd.f32 %v630, %v1790
        %v1828 = vadd.f32 %v634, %v1794
        %v1829 = vadd.f32 %v636, %v1796
        %v1830 = vadd.f32 %v640, %v1800
        %v1831 = vadd.f32 %v642, %v1802
        %v1832 = vadd.f32 %v646, %v1806
        %v1833 = vadd.f32 %v648, %v1808
        %v1834 = vadd.f32 %v652, %v1812
        %v1835 = vadd.f32 %v654, %v1814
        %v1836 = vadd.f32 %v658, %v1818
        %v1837 = vadd.f32 %v660, %v1820
        %v1838 = vtanh.pop %v1822
        %v1839 = vtanh.pop %v1823
        %v1840 = vtanh.pop %v1824
        %v1841 = vtanh.pop %v1825
        %v1842 = vtanh.pop %v1826
        %v1843 = vtanh.pop %v1827
        %v1844 = vtanh.pop %v1828
        %v1845 = vtanh.pop %v1829
        %v1846 = vtanh.pop %v1830
        %v1847 = vtanh.pop %v1831
        %v1848 = vtanh.pop %v1832
        %v1849 = vtanh.pop %v1833
        %v1850 = vtanh.pop %v1834
        %v1851 = vtanh.pop %v1835
        %v1852 = vtanh.pop %v1836
        %v1853 = vtanh.pop %v1837
        %v1854 = vmul.f32 %v1838, 0.5
        %v1855 = vmul.f32 %v1839, 0.5
        %v1856 = vmul.f32 %v1840, 0.5
        %v1857 = vmul.f32 %v1841, 0.5
        %v1858 = vmul.f32 %v1842, 0.5
        %v1859 = vmul.f32 %v1843, 0.5
        %v1860 = vmul.f32 %v1844, 0.5
        %v1861 = vmul.f32 %v1845, 0.5
        %v1862 = vadd.f32 %v1854, 0.5
        %v1863 = vadd.f32 %v1855, 0.5
        %v1864 = vadd.f32 %v1856, 0.5
        %v1865 = vadd.f32 %v1857, 0.5
        %v1866 = vadd.f32 %v1858, 0.5
        %v1867 = vadd.f32 %v1859, 0.5
        %v1868 = vadd.f32 %v1860, 0.5
        %v1869 = vadd.f32 %v1861, 0.5
        %v1870 = vsub.f32 %v1846, %v1683
        %v1871 = vsub.f32 %v1847, %v1684
        %v1872 = vsub.f32 %v1848, %v1685
        %v1873 = vsub.f32 %v1849, %v1686
        %v1874 = vsub.f32 %v1850, %v1687
        %v1875 = vsub.f32 %v1851, %v1688
        %v1876 = vsub.f32 %v1852, %v1689
        %v1877 = vsub.f32 %v1853, %v1690
        %v1878 = vmul.f32 %v1862, %v1870
        %v1879 = vmul.f32 %v1863, %v1871
        %v1880 = vmul.f32 %v1864, %v1872
        %v1881 = vmul.f32 %v1865, %v1873
        %v1882 = vmul.f32 %v1866, %v1874
        %v1883 = vmul.f32 %v1867, %v1875
        %v1884 = vmul.f32 %v1868, %v1876
        %v1885 = vmul.f32 %v1869, %v1877
        %v1886 = vadd.f32 %v1683, %v1878
        %v1887 = vadd.f32 %v1684, %v1879
        %v1888 = vadd.f32 %v1685, %v1880
        %v1889 = vadd.f32 %v1686, %v1881
        %v1890 = vadd.f32 %v1687, %v1882
        %v1891 = vadd.f32 %v1688, %v1883
        %v1892 = vadd.f32 %v1689, %v1884
        %v1893 = vadd.f32 %v1690, %v1885
        %s1894 = sld [smem:[#allocation3 + $0x5]]
        %v1895 = vstv %s1894
        %v1896 = vmul.f32 %v1895, %v1886
        %v1897 = vmul.f32 %v1895, %v1887
        %v1898 = vmul.f32 %v1895, %v1888
        %v1899 = vmul.f32 %v1895, %v1889
        %v1900 = vmul.f32 %v1895, %v1890
        %v1901 = vmul.f32 %v1895, %v1891
        %v1902 = vmul.f32 %v1895, %v1892
        %v1903 = vmul.f32 %v1895, %v1893
        %v1904 = vadd.f32 %v1701, %v1896
        %v1905 = vadd.f32 %v1702, %v1897
        %v1906 = vadd.f32 %v1703, %v1898
        %v1907 = vadd.f32 %v1704, %v1899
        %v1908 = vadd.f32 %v1705, %v1900
        %v1909 = vadd.f32 %v1706, %v1901
        %v1910 = vadd.f32 %v1707, %v1902
        %v1911 = vadd.f32 %v1708, %v1903
        %1912 = vmatprep.subr.mxu0 0.0
        %1913 = vmatpush1.msra.mxu0 0.0
        %1914 = vmatprep.subr.mxu0 0.0
        %1915 = vmatpush1.msra.mxu0 0.0
        %1916 = vmatprep.subr.mxu0 0.0
        %1917 = vmatpush1.msra.mxu0 0.0
        %1918 = vmatprep.subr.mxu0 0.0
        %1919 = vmatpush1.msra.mxu0 0.0
        %1920 = vmatprep.subr.mxu0 0.0
        %1921 = vmatpush1.msra.mxu0 0.0
        %1922 = vmatprep.subr.mxu0 0.0
        %1923 = vmatpush1.msra.mxu0 0.0
        %1924 = vmatprep.subr.mxu0 0.0
        %1925 = vmatpush1.msra.mxu0 0.0
        %1926 = vmatprep.subr.mxu0 0.0
        %1927 = vmatpush1.msra.mxu0 0.0
        %1928 = vmatprep.subr.mxu0 0.0
        %1929 = vmatpush1.msra.mxu0 0.0
        %1930 = vmatprep.subr.mxu0 0.0
        %1931 = vmatpush1.msra.mxu0 0.0
        %1932 = vmatprep.subr.mxu0 0.0
        %1933 = vmatpush1.msra.mxu0 0.0
        %1934 = vmatprep.subr.mxu0 0.0
        %1935 = vmatpush1.msra.mxu0 0.0
        %1936 = vmatprep.subr.mxu0 %v1893
        %1937 = vmatpush1.msra.mxu0 %v1892
        %1938 = vmatprep.subr.mxu0 %v1891
        %1939 = vmatpush1.msra.mxu0 %v1890
        %1940 = vmatprep.subr.mxu0 %v1889
        %1941 = vmatpush1.msra.mxu0 %v1888
        %1942 = vmatprep.subr.mxu0 %v1887
        %1943 = vmatpush1.msra.mxu0 %v1886
        %1944 = vmatprep.subr.mxu0 0.0
        %1945 = vmatpush2.msra.mxu0 0.0
        %1946 = vmatprep.subr.mxu0 0.0
        %1947 = vmatpush2.msra.mxu0 0.0
        %1948 = vmatprep.subr.mxu0 0.0
        %1949 = vmatpush2.msra.mxu0 0.0
        %1950 = vmatprep.subr.mxu0 0.0
        %1951 = vmatpush2.msra.mxu0 0.0
        %1952 = vmatprep.subr.mxu0 0.0
        %1953 = vmatpush2.msra.mxu0 0.0
        %1954 = vmatprep.subr.mxu0 0.0
        %1955 = vmatpush2.msra.mxu0 0.0
        %1956 = vmatprep.subr.mxu0 0.0
        %1957 = vmatpush2.msra.mxu0 0.0
        %1958 = vmatprep.subr.mxu0 0.0
        %1959 = vmatpush2.msra.mxu0 0.0
        %1960 = vmatprep.subr.mxu0 0.0
        %1961 = vmatpush2.msra.mxu0 0.0
        %1962 = vmatprep.subr.mxu0 0.0
        %1963 = vmatpush2.msra.mxu0 0.0
        %1964 = vmatprep.subr.mxu0 0.0
        %1965 = vmatpush2.msra.mxu0 0.0
        %1966 = vmatprep.subr.mxu0 0.0
        %1967 = vmatpush2.msra.mxu0 0.0
        %1968 = vmatprep.subr.mxu0 0.0
        %1969 = vmatpush2.msra.mxu0 0.0
        %1970 = vmatprep.subr.mxu0 0.0
        %1971 = vmatpush2.msra.mxu0 0.0
        %1972 = vmatprep.subr.mxu0 0.0
        %1973 = vmatpush2.msra.mxu0 0.0
        %1974 = vmatprep.subr.mxu0 0.0
        %1975 = vmatpush2.msra.mxu0 0.0
        %1976 = vmatprep.mubr.f32.mxu0 0.0
        %1977 = vmatmul.mubr.f32.gmra.mxu0 %v671
        %v1978 = vpop.f32.mrf.mxu0
        %v1979 = vadd.f32 0.0, %v1978
        %v1980 = vpop.f32.mrf.mxu0
        %v1981 = vadd.f32 0.0, %v1980
        %1982 = vmatprep.mubr.f32.mxu0 0.0
        %1983 = vmatmul.mubr.f32.gmra.mxu0 %v674
        %v1984 = vpop.f32.mrf.mxu0
        %v1985 = vadd.f32 0.0, %v1984
        %v1986 = vpop.f32.mrf.mxu0
        %v1987 = vadd.f32 0.0, %v1986
        %1988 = vmatprep.mubr.f32.mxu0 0.0
        %1989 = vmatmul.mubr.f32.gmra.mxu0 %v677
        %v1990 = vpop.f32.mrf.mxu0
        %v1991 = vadd.f32 0.0, %v1990
        %v1992 = vpop.f32.mrf.mxu0
        %v1993 = vadd.f32 0.0, %v1992
        %1994 = vmatprep.mubr.f32.mxu0 0.0
        %1995 = vmatmul.mubr.f32.gmra.mxu0 %v680
        %v1996 = vpop.f32.mrf.mxu0
        %v1997 = vadd.f32 0.0, %v1996
        %v1998 = vpop.f32.mrf.mxu0
        %v1999 = vadd.f32 0.0, %v1998
        %2000 = vmatprep.mubr.f32.mxu0 0.0
        %2001 = vmatmul.mubr.f32.gmra.mxu0 %v683
        %v2002 = vpop.f32.mrf.mxu0
        %v2003 = vadd.f32 0.0, %v2002
        %v2004 = vpop.f32.mrf.mxu0
        %v2005 = vadd.f32 0.0, %v2004
        %2006 = vmatprep.mubr.f32.mxu0 0.0
        %2007 = vmatmul.mubr.f32.gmra.mxu0 %v686
        %v2008 = vpop.f32.mrf.mxu0
        %v2009 = vadd.f32 0.0, %v2008
        %v2010 = vpop.f32.mrf.mxu0
        %v2011 = vadd.f32 0.0, %v2010
        %2012 = vmatprep.mubr.f32.mxu0 0.0
        %2013 = vmatmul.mubr.f32.gmra.mxu0 %v689
        %v2014 = vpop.f32.mrf.mxu0
        %v2015 = vadd.f32 0.0, %v2014
        %v2016 = vpop.f32.mrf.mxu0
        %v2017 = vadd.f32 0.0, %v2016
        %2018 = vmatprep.mubr.f32.mxu0 0.0
        %2019 = vmatmul.mubr.f32.gmra.mxu0 %v692
        %v2020 = vpop.f32.mrf.mxu0
        %v2021 = vadd.f32 0.0, %v2020
        %v2022 = vpop.f32.mrf.mxu0
        %v2023 = vadd.f32 0.0, %v2022
        %2024 = vdwg.mxu0
        %v2025 = vadd.f32 %v616, %v1979
        %v2026 = vadd.f32 %v618, %v1981
        %v2027 = vadd.f32 %v622, %v1985
        %v2028 = vadd.f32 %v624, %v1987
        %v2029 = vadd.f32 %v628, %v1991
        %v2030 = vadd.f32 %v630, %v1993
        %v2031 = vadd.f32 %v634, %v1997
        %v2032 = vadd.f32 %v636, %v1999
        %v2033 = vadd.f32 %v640, %v2003
        %v2034 = vadd.f32 %v642, %v2005
        %v2035 = vadd.f32 %v646, %v2009
        %v2036 = vadd.f32 %v648, %v2011
        %v2037 = vadd.f32 %v652, %v2015
        %v2038 = vadd.f32 %v654, %v2017
        %v2039 = vadd.f32 %v658, %v2021
        %v2040 = vadd.f32 %v660, %v2023
        %v2041 = vtanh.pop %v2025
        %v2042 = vtanh.pop %v2026
        %v2043 = vtanh.pop %v2027
        %v2044 = vtanh.pop %v2028
        %v2045 = vtanh.pop %v2029
        %v2046 = vtanh.pop %v2030
        %v2047 = vtanh.pop %v2031
        %v2048 = vtanh.pop %v2032
        %v2049 = vtanh.pop %v2033
        %v2050 = vtanh.pop %v2034
        %v2051 = vtanh.pop %v2035
        %v2052 = vtanh.pop %v2036
        %v2053 = vtanh.pop %v2037
        %v2054 = vtanh.pop %v2038
        %v2055 = vtanh.pop %v2039
        %v2056 = vtanh.pop %v2040
        %v2057 = vmul.f32 %v2041, 0.5
        %v2058 = vmul.f32 %v2042, 0.5
        %v2059 = vmul.f32 %v2043, 0.5
        %v2060 = vmul.f32 %v2044, 0.5
        %v2061 = vmul.f32 %v2045, 0.5
        %v2062 = vmul.f32 %v2046, 0.5
        %v2063 = vmul.f32 %v2047, 0.5
        %v2064 = vmul.f32 %v2048, 0.5
        %v2065 = vadd.f32 %v2057, 0.5
        %v2066 = vadd.f32 %v2058, 0.5
        %v2067 = vadd.f32 %v2059, 0.5
        %v2068 = vadd.f32 %v2060, 0.5
        %v2069 = vadd.f32 %v2061, 0.5
        %v2070 = vadd.f32 %v2062, 0.5
        %v2071 = vadd.f32 %v2063, 0.5
        %v2072 = vadd.f32 %v2064, 0.5
        %v2073 = vsub.f32 %v2049, %v1886
        %v2074 = vsub.f32 %v2050, %v1887
        %v2075 = vsub.f32 %v2051, %v1888
        %v2076 = vsub.f32 %v2052, %v1889
        %v2077 = vsub.f32 %v2053, %v1890
        %v2078 = vsub.f32 %v2054, %v1891
        %v2079 = vsub.f32 %v2055, %v1892
        %v2080 = vsub.f32 %v2056, %v1893
        %v2081 = vmul.f32 %v2065, %v2073
        %v2082 = vmul.f32 %v2066, %v2074
        %v2083 = vmul.f32 %v2067, %v2075
        %v2084 = vmul.f32 %v2068, %v2076
        %v2085 = vmul.f32 %v2069, %v2077
        %v2086 = vmul.f32 %v2070, %v2078
        %v2087 = vmul.f32 %v2071, %v2079
        %v2088 = vmul.f32 %v2072, %v2080
        %v2089 = vadd.f32 %v1886, %v2081
        %v2090 = vadd.f32 %v1887, %v2082
        %v2091 = vadd.f32 %v1888, %v2083
        %v2092 = vadd.f32 %v1889, %v2084
        %v2093 = vadd.f32 %v1890, %v2085
        %v2094 = vadd.f32 %v1891, %v2086
        %v2095 = vadd.f32 %v1892, %v2087
        %v2096 = vadd.f32 %v1893, %v2088
        %s2097 = sld [smem:[#allocation3 + $0x6]]
        %v2098 = vstv %s2097
        %v2099 = vmul.f32 %v2098, %v2089
        %v2100 = vmul.f32 %v2098, %v2090
        %v2101 = vmul.f32 %v2098, %v2091
        %v2102 = vmul.f32 %v2098, %v2092
        %v2103 = vmul.f32 %v2098, %v2093
        %v2104 = vmul.f32 %v2098, %v2094
        %v2105 = vmul.f32 %v2098, %v2095
        %v2106 = vmul.f32 %v2098, %v2096
        %v2107 = vadd.f32 %v1904, %v2099
        %v2108 = vadd.f32 %v1905, %v2100
        %v2109 = vadd.f32 %v1906, %v2101
        %v2110 = vadd.f32 %v1907, %v2102
        %v2111 = vadd.f32 %v1908, %v2103
        %v2112 = vadd.f32 %v1909, %v2104
        %v2113 = vadd.f32 %v1910, %v2105
        %v2114 = vadd.f32 %v1911, %v2106
        %2115 = vmatprep.subr.mxu0 0.0
        %2116 = vmatpush1.msra.mxu0 0.0
        %2117 = vmatprep.subr.mxu0 0.0
        %2118 = vmatpush1.msra.mxu0 0.0
        %2119 = vmatprep.subr.mxu0 0.0
        %2120 = vmatpush1.msra.mxu0 0.0
        %2121 = vmatprep.subr.mxu0 0.0
        %2122 = vmatpush1.msra.mxu0 0.0
        %2123 = vmatprep.subr.mxu0 0.0
        %2124 = vmatpush1.msra.mxu0 0.0
        %2125 = vmatprep.subr.mxu0 0.0
        %2126 = vmatpush1.msra.mxu0 0.0
        %2127 = vmatprep.subr.mxu0 0.0
        %2128 = vmatpush1.msra.mxu0 0.0
        %2129 = vmatprep.subr.mxu0 0.0
        %2130 = vmatpush1.msra.mxu0 0.0
        %2131 = vmatprep.subr.mxu0 0.0
        %2132 = vmatpush1.msra.mxu0 0.0
        %2133 = vmatprep.subr.mxu0 0.0
        %2134 = vmatpush1.msra.mxu0 0.0
        %2135 = vmatprep.subr.mxu0 0.0
        %2136 = vmatpush1.msra.mxu0 0.0
        %2137 = vmatprep.subr.mxu0 0.0
        %2138 = vmatpush1.msra.mxu0 0.0
        %2139 = vmatprep.subr.mxu0 %v2096
        %2140 = vmatpush1.msra.mxu0 %v2095
        %2141 = vmatprep.subr.mxu0 %v2094
        %2142 = vmatpush1.msra.mxu0 %v2093
        %2143 = vmatprep.subr.mxu0 %v2092
        %2144 = vmatpush1.msra.mxu0 %v2091
        %2145 = vmatprep.subr.mxu0 %v2090
        %2146 = vmatpush1.msra.mxu0 %v2089
        %2147 = vmatprep.subr.mxu0 0.0
        %2148 = vmatpush2.msra.mxu0 0.0
        %2149 = vmatprep.subr.mxu0 0.0
        %2150 = vmatpush2.msra.mxu0 0.0
        %2151 = vmatprep.subr.mxu0 0.0
        %2152 = vmatpush2.msra.mxu0 0.0
        %2153 = vmatprep.subr.mxu0 0.0
        %2154 = vmatpush2.msra.mxu0 0.0
        %2155 = vmatprep.subr.mxu0 0.0
        %2156 = vmatpush2.msra.mxu0 0.0
        %2157 = vmatprep.subr.mxu0 0.0
        %2158 = vmatpush2.msra.mxu0 0.0
        %2159 = vmatprep.subr.mxu0 0.0
        %2160 = vmatpush2.msra.mxu0 0.0
        %2161 = vmatprep.subr.mxu0 0.0
        %2162 = vmatpush2.msra.mxu0 0.0
        %2163 = vmatprep.subr.mxu0 0.0
        %2164 = vmatpush2.msra.mxu0 0.0
        %2165 = vmatprep.subr.mxu0 0.0
        %2166 = vmatpush2.msra.mxu0 0.0
        %2167 = vmatprep.subr.mxu0 0.0
        %2168 = vmatpush2.msra.mxu0 0.0
        %2169 = vmatprep.subr.mxu0 0.0
        %2170 = vmatpush2.msra.mxu0 0.0
        %2171 = vmatprep.subr.mxu0 0.0
        %2172 = vmatpush2.msra.mxu0 0.0
        %2173 = vmatprep.subr.mxu0 0.0
        %2174 = vmatpush2.msra.mxu0 0.0
        %2175 = vmatprep.subr.mxu0 0.0
        %2176 = vmatpush2.msra.mxu0 0.0
        %2177 = vmatprep.subr.mxu0 0.0
        %2178 = vmatpush2.msra.mxu0 0.0
        %2179 = vmatprep.mubr.f32.mxu0 0.0
        %2180 = vmatmul.mubr.f32.gmra.mxu0 %v671
        %v2181 = vpop.f32.mrf.mxu0
        %v2182 = vadd.f32 0.0, %v2181
        %v2183 = vpop.f32.mrf.mxu0
        %v2184 = vadd.f32 0.0, %v2183
        %2185 = vmatprep.mubr.f32.mxu0 0.0
        %2186 = vmatmul.mubr.f32.gmra.mxu0 %v674
        %v2187 = vpop.f32.mrf.mxu0
        %v2188 = vadd.f32 0.0, %v2187
        %v2189 = vpop.f32.mrf.mxu0
        %v2190 = vadd.f32 0.0, %v2189
        %2191 = vmatprep.mubr.f32.mxu0 0.0
        %2192 = vmatmul.mubr.f32.gmra.mxu0 %v677
        %v2193 = vpop.f32.mrf.mxu0
        %v2194 = vadd.f32 0.0, %v2193
        %v2195 = vpop.f32.mrf.mxu0
        %v2196 = vadd.f32 0.0, %v2195
        %2197 = vmatprep.mubr.f32.mxu0 0.0
        %2198 = vmatmul.mubr.f32.gmra.mxu0 %v680
        %v2199 = vpop.f32.mrf.mxu0
        %v2200 = vadd.f32 0.0, %v2199
        %v2201 = vpop.f32.mrf.mxu0
        %v2202 = vadd.f32 0.0, %v2201
        %2203 = vmatprep.mubr.f32.mxu0 0.0
        %2204 = vmatmul.mubr.f32.gmra.mxu0 %v683
        %v2205 = vpop.f32.mrf.mxu0
        %v2206 = vadd.f32 0.0, %v2205
        %v2207 = vpop.f32.mrf.mxu0
        %v2208 = vadd.f32 0.0, %v2207
        %2209 = vmatprep.mubr.f32.mxu0 0.0
        %2210 = vmatmul.mubr.f32.gmra.mxu0 %v686
        %v2211 = vpop.f32.mrf.mxu0
        %v2212 = vadd.f32 0.0, %v2211
        %v2213 = vpop.f32.mrf.mxu0
        %v2214 = vadd.f32 0.0, %v2213
        %2215 = vmatprep.mubr.f32.mxu0 0.0
        %2216 = vmatmul.mubr.f32.gmra.mxu0 %v689
        %v2217 = vpop.f32.mrf.mxu0
        %v2218 = vadd.f32 0.0, %v2217
        %v2219 = vpop.f32.mrf.mxu0
        %v2220 = vadd.f32 0.0, %v2219
        %2221 = vmatprep.mubr.f32.mxu0 0.0
        %2222 = vmatmul.mubr.f32.gmra.mxu0 %v692
        %v2223 = vpop.f32.mrf.mxu0
        %v2224 = vadd.f32 0.0, %v2223
        %v2225 = vpop.f32.mrf.mxu0
        %v2226 = vadd.f32 0.0, %v2225
        %2227 = vdwg.mxu0
        %v2228 = vadd.f32 %v616, %v2182
        %v2229 = vadd.f32 %v618, %v2184
        %v2230 = vadd.f32 %v622, %v2188
        %v2231 = vadd.f32 %v624, %v2190
        %v2232 = vadd.f32 %v628, %v2194
        %v2233 = vadd.f32 %v630, %v2196
        %v2234 = vadd.f32 %v634, %v2200
        %v2235 = vadd.f32 %v636, %v2202
        %v2236 = vadd.f32 %v640, %v2206
        %v2237 = vadd.f32 %v642, %v2208
        %v2238 = vadd.f32 %v646, %v2212
        %v2239 = vadd.f32 %v648, %v2214
        %v2240 = vadd.f32 %v652, %v2218
        %v2241 = vadd.f32 %v654, %v2220
        %v2242 = vadd.f32 %v658, %v2224
        %v2243 = vadd.f32 %v660, %v2226
        %v2244 = vtanh.pop %v2228
        %v2245 = vtanh.pop %v2229
        %v2246 = vtanh.pop %v2230
        %v2247 = vtanh.pop %v2231
        %v2248 = vtanh.pop %v2232
        %v2249 = vtanh.pop %v2233
        %v2250 = vtanh.pop %v2234
        %v2251 = vtanh.pop %v2235
        %v2252 = vtanh.pop %v2236
        %v2253 = vtanh.pop %v2237
        %v2254 = vtanh.pop %v2238
        %v2255 = vtanh.pop %v2239
        %v2256 = vtanh.pop %v2240
        %v2257 = vtanh.pop %v2241
        %v2258 = vtanh.pop %v2242
        %v2259 = vtanh.pop %v2243
        %v2260 = vmul.f32 %v2244, 0.5
        %v2261 = vmul.f32 %v2245, 0.5
        %v2262 = vmul.f32 %v2246, 0.5
        %v2263 = vmul.f32 %v2247, 0.5
        %v2264 = vmul.f32 %v2248, 0.5
        %v2265 = vmul.f32 %v2249, 0.5
        %v2266 = vmul.f32 %v2250, 0.5
        %v2267 = vmul.f32 %v2251, 0.5
        %v2268 = vadd.f32 %v2260, 0.5
        %v2269 = vadd.f32 %v2261, 0.5
        %v2270 = vadd.f32 %v2262, 0.5
        %v2271 = vadd.f32 %v2263, 0.5
        %v2272 = vadd.f32 %v2264, 0.5
        %v2273 = vadd.f32 %v2265, 0.5
        %v2274 = vadd.f32 %v2266, 0.5
        %v2275 = vadd.f32 %v2267, 0.5
        %v2276 = vsub.f32 %v2252, %v2089
        %v2277 = vsub.f32 %v2253, %v2090
        %v2278 = vsub.f32 %v2254, %v2091
        %v2279 = vsub.f32 %v2255, %v2092
        %v2280 = vsub.f32 %v2256, %v2093
        %v2281 = vsub.f32 %v2257, %v2094
        %v2282 = vsub.f32 %v2258, %v2095
        %v2283 = vsub.f32 %v2259, %v2096
        %v2284 = vmul.f32 %v2268, %v2276
        %v2285 = vmul.f32 %v2269, %v2277
        %v2286 = vmul.f32 %v2270, %v2278
        %v2287 = vmul.f32 %v2271, %v2279
        %v2288 = vmul.f32 %v2272, %v2280
        %v2289 = vmul.f32 %v2273, %v2281
        %v2290 = vmul.f32 %v2274, %v2282
        %v2291 = vmul.f32 %v2275, %v2283
        %v2292 = vadd.f32 %v2089, %v2284
        %v2293 = vadd.f32 %v2090, %v2285
        %v2294 = vadd.f32 %v2091, %v2286
        %v2295 = vadd.f32 %v2092, %v2287
        %v2296 = vadd.f32 %v2093, %v2288
        %v2297 = vadd.f32 %v2094, %v2289
        %v2298 = vadd.f32 %v2095, %v2290
        %v2299 = vadd.f32 %v2096, %v2291
        %s2300 = sld [smem:[#allocation3 + $0x7]]
        %v2301 = vstv %s2300
        %v2302 = vmul.f32 %v2301, %v2292
        %v2303 = vmul.f32 %v2301, %v2293
        %v2304 = vmul.f32 %v2301, %v2294
        %v2305 = vmul.f32 %v2301, %v2295
        %v2306 = vmul.f32 %v2301, %v2296
        %v2307 = vmul.f32 %v2301, %v2297
        %v2308 = vmul.f32 %v2301, %v2298
        %v2309 = vmul.f32 %v2301, %v2299
        %v2310 = vadd.f32 %v2107, %v2302
        %v2311 = vadd.f32 %v2108, %v2303
        %v2312 = vadd.f32 %v2109, %v2304
        %v2313 = vadd.f32 %v2110, %v2305
        %v2314 = vadd.f32 %v2111, %v2306
        %v2315 = vadd.f32 %v2112, %v2307
        %v2316 = vadd.f32 %v2113, %v2308
        %v2317 = vadd.f32 %v2114, %v2309
        %2318 = vst [vmem:[%s248] sm:$0xff] %v2310
        %2319 = vst [vmem:[%s248 + $0x8] sm:$0xff] %v2311
        %2320 = vst [vmem:[%s248 + $0x10] sm:$0xff] %v2312
        %2321 = vst [vmem:[%s248 + $0x18] sm:$0xff] %v2313
        %2322 = vst [vmem:[%s248 + $0x20] sm:$0xff] %v2314
        %2323 = vst [vmem:[%s248 + $0x28] sm:$0xff] %v2315
        %2324 = vst [vmem:[%s248 + $0x30] sm:$0xff] %v2316
        %2325 = vst [vmem:[%s248 + $0x38] sm:$0xff] %v2317
        %s2326 = sand.u32 %s163, 1
        %s2327 = sand.u32 %s163, 1
        %s2328 = smul.addr %s2327, 64
        %s2329 = scalar_lea.vmem [#allocation4], %s2328
        // Predicated region
        $region45: #{raft_avg_backbone_forward.1} parent=43 // pred_check
          %p2330 = pneg %p173
        $region46: #{raft_avg_backbone_forward.1} parent=43 // pred_check_branch
          %2332 = sbr.rel (%p2330) target = $region48
        $region47: #{raft_avg_backbone_forward.1} parent=43 // pred_region
          %s2333 = smul.u32 2, %s24
          %s2334 = smul.addr %s2333, 8
          %s2335 = scalar_lea.vmem %s7, %s2334
          // Predicated region
          $region49: #{raft_avg_backbone_forward.1} parent=47 // pred_check
            _
          $region50: #{raft_avg_backbone_forward.1} parent=47 // pred_check_branch
            %2337 = sbr.rel (0) target = $region52
          $region51: #{raft_avg_backbone_forward.1} parent=47 // pred_region
            // Predicated region
            $region53: #{raft_avg_backbone_forward.1} parent=51 // pred_check
              _
            $region54: #{raft_avg_backbone_forward.1} parent=51 // pred_check_branch
              %2339 = sbr.rel (0) target = $region56
            $region55: #{raft_avg_backbone_forward.1} parent=51 // pred_region
              loop: start=0, step=1, limit=1
              $region57: #{raft_avg_backbone_forward.1} parent=55 // loop_pre_header
                _
              $region58: #{raft_avg_backbone_forward.1} parent=55 // loop_header
                %s2341 = sphi 0, %s2345
                %p2342 = scmp.ge.s32.totalorder %s2341, 1
                %s2346 = sphi %s2329, %s2329
                %s2347 = sphi %s2335, %s2335
              $region59: #{raft_avg_backbone_forward.1} parent=55 // loop_header_branch
                %2344 = sbr.rel (%p2342) target = $region63
              $region60: #{raft_avg_backbone_forward.1} parent=55 // loop_body
                %v2348 = vld [vmem:[%s2346] sm:$0xff]
                %2349 = vst [vmem:[%s2347] sm:$0xff] %v2348
                %v2350 = vld [vmem:[%s2346 + $0x8] sm:$0xff]
                %2351 = vst [vmem:[%s2347 + $0x8] sm:$0xff] %v2350
                %v2352 = vld [vmem:[%s2346 + $0x10] sm:$0xff]
                %2353 = vst [vmem:[%s2347 + $0x20] sm:$0xff] %v2352
                %v2354 = vld [vmem:[%s2346 + $0x18] sm:$0xff]
                %2355 = vst [vmem:[%s2347 + $0x28] sm:$0xff] %v2354
                %v2356 = vld [vmem:[%s2346 + $0x20] sm:$0xff]
                %2357 = vst [vmem:[%s2347 + $0x40] sm:$0xff] %v2356
                %v2358 = vld [vmem:[%s2346 + $0x28] sm:$0xff]
                %2359 = vst [vmem:[%s2347 + $0x48] sm:$0xff] %v2358
                %v2360 = vld [vmem:[%s2346 + $0x30] sm:$0xff]
                %2361 = vst [vmem:[%s2347 + $0x60] sm:$0xff] %v2360
                %v2362 = vld [vmem:[%s2346 + $0x38] sm:$0xff]
                %2363 = vst [vmem:[%s2347 + $0x68] sm:$0xff] %v2362
              $region61: #{raft_avg_backbone_forward.1} parent=55 // loop_footer
                %s2345 = sadd.s32 1, %s2341
              $region62: #{raft_avg_backbone_forward.1} parent=55 // loop_footer_branch
                %2340 = sbr.rel target = $region58
              $region63: #{raft_avg_backbone_forward.1} parent=55 // loop_exit
                _
            $region56: #{raft_avg_backbone_forward.1} parent=51 // pred_fallthru
              _
            // Predicated region
            $region64: #{raft_avg_backbone_forward.1} parent=51 // pred_check
              _
            $region65: #{raft_avg_backbone_forward.1} parent=51 // pred_check_branch
              %2365 = sbr.rel target = $region67
            $region66: #{raft_avg_backbone_forward.1} parent=51 // pred_region
              _
            $region67: #{raft_avg_backbone_forward.1} parent=51 // pred_fallthru
              _
          $region52: #{raft_avg_backbone_forward.1} parent=47 // pred_fallthru
            _
          %2366 = vnop
        $region48: #{raft_avg_backbone_forward.1} parent=43 // pred_fallthru
          _
      $region44: #{raft_avg_backbone_forward.1} parent=5 // pred_fallthru
        _
      %p2367 = scmp.le.s32.totalorder 2, %s19
      // Predicated region
      $region68: #{raft_avg_backbone_forward.1} parent=5 // pred_check
        %p2368 = pneg %p2367
      $region69: #{raft_avg_backbone_forward.1} parent=5 // pred_check_branch
        %2370 = sbr.rel (%p2368) target = $region71
      $region70: #{raft_avg_backbone_forward.1} parent=5 // pred_region
        %s2371 = ssub.s32 %s19, 2
        // Predicated region
        $region72: #{raft_avg_backbone_forward.1} parent=70 // pred_check
          %p2372 = pneg %p179
        $region73: #{raft_avg_backbone_forward.1} parent=70 // pred_check_branch
          %2374 = sbr.rel (%p2372) target = $region75
        $region74: #{raft_avg_backbone_forward.1} parent=70 // pred_region
          %s2375 = sand.u32 %s164, 1
          %s2376 = sand.u32 %s164, 1
          %s2377 = smul.addr %s2376, 64
          %s2378 = scalar_lea.vmem [#allocation4], %s2377
        $region75: #{raft_avg_backbone_forward.1} parent=70 // pred_fallthru
          _
      $region71: #{raft_avg_backbone_forward.1} parent=5 // pred_fallthru
        _
    $region6: #{raft_avg_backbone_forward.1} parent=1 // loop_footer
      %s23 = sadd.s32 1, %s19
    $region7: #{raft_avg_backbone_forward.1} parent=1 // loop_footer_branch
      %18 = sbr.rel target = $region3
    $region8: #{raft_avg_backbone_forward.1} parent=1 // loop_exit
      _

</llo_original>
